<compile_context>
chip_gen: v5e
topology: v5e:2x2
jax: 0.10.0
libtpu: 0.0.40
codegen_flags: <defaults>
</compile_context>

<pallas_src>
import functools

import jax
import jax.numpy as jnp
from jax.experimental import pallas as pl
from jax.experimental.pallas import tpu as pltpu


def _tile(dim, cap):
    """Largest tile <= cap that evenly divides dim (falls back to full dim)."""
    if dim <= cap:
        return dim
    if dim % cap == 0:
        return cap
    return dim


# ----------------------------------------------------------------------------
# Fused (multi-operand) matmul kernel:  out = sum_i x_i @ w_i + bias
# Used for: hoisted LSTM gate projections (1 or 2 operands -> fused concat)
# and the classifier Linear.  bf16 MXU matmuls, f32 accumulation.
# Grid is (M tiles, N tiles, K tiles); the K axis is "arbitrary" and the
# f32 accumulator lives in VMEM scratch (bias added on the last K step).
# ----------------------------------------------------------------------------
def _fused_matmul_kernel(n_inputs, nk, *refs):
    xs = refs[:n_inputs]
    ws = refs[n_inputs:2 * n_inputs]
    b_ref = refs[2 * n_inputs]
    o_ref = refs[2 * n_inputs + 1]
    acc_ref = refs[2 * n_inputs + 2]

    @pl.when(pl.program_id(2) == 0)
    def _():
        acc_ref[...] = jnp.zeros_like(acc_ref)

    acc = acc_ref[...]
    for x_ref, w_ref in zip(xs, ws):
        acc = acc + jnp.dot(x_ref[...].astype(w_ref.dtype), w_ref[...],
                            preferred_element_type=jnp.float32)
    acc_ref[...] = acc

    @pl.when(pl.program_id(2) == nk - 1)
    def _():
        o_ref[...] = acc_ref[...] + b_ref[...]


def fused_matmul(xs, ws, bias, *, tm_cap=256, tn_cap=512, tk_cap=1024):
    """xs[i]: (M, K_i) f32; ws[i]: (K_i, N) bf16; bias: (1, N) f32 -> (M, N) f32."""
    n = len(xs)
    M = xs[0].shape[0]
    N = ws[0].shape[1]
    ks = [x.shape[1] for x in xs]
    tm = _tile(M, tm_cap)
    tn = _tile(N, tn_cap)

    # Tile K only when every operand shares the same K and it divides evenly;
    # otherwise each operand streams its full (distinct) K every grid step.
    same_k = all(k == ks[0] for k in ks)
    if same_k and ks[0] > tk_cap and ks[0] % tk_cap == 0:
        tk = tk_cap
        nk = ks[0] // tk
        x_specs = [pl.BlockSpec((tm, tk), lambda i, j, k: (i, k)) for _ in xs]
        w_specs = [pl.BlockSpec((tk, tn), lambda i, j, k: (k, j)) for _ in ws]
    else:
        nk = 1
        x_specs = [pl.BlockSpec((tm, kd), lambda i, j, k: (i, 0)) for kd in ks]
        w_specs = [pl.BlockSpec((kd, tn), lambda i, j, k: (0, j)) for kd in ks]

    in_specs = x_specs + w_specs + [pl.BlockSpec((1, tn), lambda i, j, k: (0, j))]
    return pl.pallas_call(
        functools.partial(_fused_matmul_kernel, n, nk),
        out_shape=jax.ShapeDtypeStruct((M, N), jnp.float32),
        grid=(M // tm, N // tn, nk),
        in_specs=in_specs,
        out_specs=pl.BlockSpec((tm, tn), lambda i, j, k: (i, j)),
        scratch_shapes=[pltpu.VMEM((tm, tn), jnp.float32)],
        compiler_params=pltpu.CompilerParams(
            dimension_semantics=("parallel", "parallel", "arbitrary")),
    )(*xs, *ws, bias)


# ----------------------------------------------------------------------------
# LSTM recurrent kernel: grid over time CHUNKS, inner lax.fori_loop over the
# timesteps of the chunk.  Gates are precomputed (x @ W_ih + b); per step only
# h @ W_hh is done here.  (h, c) persist in VMEM scratch across grid steps.
# Optional residual is fused into the output store.
# Gate order follows PyTorch nn.LSTM: [i, f, g, o].
# ----------------------------------------------------------------------------
def _lstm_recurrent_kernel(has_residual, *refs):
    if has_residual:
        g_ref, whh_ref, res_ref, out_ref, h_scr, c_scr = refs
    else:
        g_ref, whh_ref, out_ref, h_scr, c_scr = refs
        res_ref = None

    @pl.when(pl.program_id(0) == 0)
    def _():
        # hidden is None in the reference forward -> zero initial state.
        h_scr[...] = jnp.zeros_like(h_scr)
        c_scr[...] = jnp.zeros_like(c_scr)

    H = h_scr.shape[-1]
    tc = g_ref.shape[0]                   # static chunk length

    def step(t, carry):
        # W_hh is read from its pipelined VMEM buffer (constant block index
        # across the grid -> DMA'd once, no extra resident copy).
        gates = g_ref[t] + jnp.dot(h_scr[...].astype(whh_ref.dtype),
                                   whh_ref[...],
                                   preferred_element_type=jnp.float32)  # (B,4H)
        i_g = jax.nn.sigmoid(gates[:, 0 * H:1 * H])
        f_g = jax.nn.sigmoid(gates[:, 1 * H:2 * H])
        g_g = jnp.tanh(gates[:, 2 * H:3 * H])
        o_g = jax.nn.sigmoid(gates[:, 3 * H:4 * H])
        c_new = f_g * c_scr[...] + i_g * g_g
        h_new = o_g * jnp.tanh(c_new)
        c_scr[...] = c_new
        h_scr[...] = h_new
        if has_residual:
            out_ref[t] = h_new + res_ref[t]
        else:
            out_ref[t] = h_new
        return carry

    jax.lax.fori_loop(0, tc, step, 0, unroll=tc <= 8)


def lstm_recurrent(gates, whh, residual=None, *, tc_cap=32):
    """gates: (T, B, 4H) f32 (precomputed x@W_ih+b); whh: (H, 4H) bf16.

    Returns hidden-state sequence (T, B, H) f32, with the residual (if given)
    already added."""
    T, B, _ = gates.shape
    H = whh.shape[0]
    tc = _tile(T, tc_cap)
    in_specs = [
        pl.BlockSpec((tc, B, 4 * H), lambda t: (t, 0, 0)),
        pl.BlockSpec((H, 4 * H), lambda t: (0, 0)),
    ]
    args = [gates, whh]
    if residual is not None:
        in_specs.append(pl.BlockSpec((tc, B, H), lambda t: (t, 0, 0)))
        args.append(residual)
    return pl.pallas_call(
        functools.partial(_lstm_recurrent_kernel, residual is not None),
        out_shape=jax.ShapeDtypeStruct((T, B, H), jnp.float32),
        grid=(T // tc,),
        in_specs=in_specs,
        out_specs=pl.BlockSpec((tc, B, H), lambda t: (t, 0, 0)),
        scratch_shapes=[pltpu.VMEM((B, H), jnp.float32),
                        pltpu.VMEM((B, H), jnp.float32)],
        compiler_params=pltpu.CompilerParams(
            # (h, c) carried in scratch across grid steps -> must stay serial.
            dimension_semantics=("arbitrary",)),
    )(*args)


# ----------------------------------------------------------------------------
# Normalized Bahdanau attention kernel: grid over batch ("parallel").
#   score(q, k) = v_norm . tanh(Wq q + Wk k + bias)   (v_norm hoisted outside)
#   mask positions >= context_len, softmax over keys, context = probs @ keys.
# ----------------------------------------------------------------------------
def _attn_kernel(len_ref, q_ref, k_ref, wq_ref, wk_ref, nb_ref, vn_ref,
                 ctx_ref, sc_ref):
    b = pl.program_id(0)
    q = q_ref[0].astype(wq_ref.dtype)                          # (Tq, H) bf16
    k = k_ref[0].astype(wk_ref.dtype)                          # (Tk, H) bf16

    pq = jnp.dot(q, wq_ref[...], preferred_element_type=jnp.float32)   # (Tq, H)
    pk = jnp.dot(k, wk_ref[...], preferred_element_type=jnp.float32)   # (Tk, H)

    sum_qk = pq[:, None, :] + pk[None, :, :] + nb_ref[...]     # (Tq, Tk, H) f32
    # TODO(synk): the H-contraction stays on VPU/XLU (tanh on the EUP is the
    # dominant cost here); an MXU (Tq*Tk,H)@(H,1) variant needs a relayout,
    # and very long Tk would additionally want a Tk-chunked inner loop.
    scores = jnp.sum(jnp.tanh(sum_qk) * vn_ref[...], axis=-1)  # (Tq, Tk)

    length = len_ref[b]
    key_idx = jax.lax.broadcasted_iota(jnp.int32, scores.shape, 1)
    scores = jnp.where(key_idx >= length, -65504.0, scores)

    m = jnp.max(scores, axis=-1, keepdims=True)
    e = jnp.exp(scores - m)
    probs = e * pl.reciprocal(jnp.sum(e, axis=-1, keepdims=True), approx=False)

    ctx_ref[0] = jnp.dot(probs.astype(k.dtype), k,
                         preferred_element_type=jnp.float32)   # (Tq, H)
    sc_ref[0] = probs


def bahdanau_attention(query, keys, context_len, wq, wk, norm_bias, att_v,
                       norm_scalar):
    """query: (Tq, B, H), keys: (Tk, B, H), context_len: (B,) int32.

    Returns (context (Tq, B, H), scores (Tq, B, Tk)) — time-major, matching
    the PyTorch module (batch_first=False)."""
    Tq, B, H = query.shape
    Tk = keys.shape[0]

    # Batch-invariant v_norm = g * v / ||v|| hoisted out of the kernel (f32).
    v = att_v.astype(jnp.float32)
    v_norm = v * (norm_scalar[0, 0] * jax.lax.rsqrt(jnp.sum(v * v)))   # (1, H)

    # TODO(synk): batch-first transposes kept as XLA glue; scores last dim
    # (Tk) < 128 still hits masked stores at toy sizes.
    q_bf = jnp.transpose(query, (1, 0, 2))                     # (B, Tq, H)
    k_bf = jnp.transpose(keys, (1, 0, 2))                      # (B, Tk, H)

    grid_spec = pltpu.PrefetchScalarGridSpec(
        num_scalar_prefetch=1,
        grid=(B,),
        in_specs=[
            pl.BlockSpec((1, Tq, H), lambda b, L: (b, 0, 0)),
            pl.BlockSpec((1, Tk, H), lambda b, L: (b, 0, 0)),
            pl.BlockSpec((H, H), lambda b, L: (0, 0)),
            pl.BlockSpec((H, H), lambda b, L: (0, 0)),
            pl.BlockSpec((1, H), lambda b, L: (0, 0)),
            pl.BlockSpec((1, H), lambda b, L: (0, 0)),
        ],
        out_specs=[
            pl.BlockSpec((1, Tq, H), lambda b, L: (b, 0, 0)),
            pl.BlockSpec((1, Tq, Tk), lambda b, L: (b, 0, 0)),
        ],
    )
    ctx_bf, sc_bf = pl.pallas_call(
        _attn_kernel,
        out_shape=(
            jax.ShapeDtypeStruct((B, Tq, H), jnp.float32),
            jax.ShapeDtypeStruct((B, Tq, Tk), jnp.float32),
        ),
        grid_spec=grid_spec,
        compiler_params=pltpu.CompilerParams(
            # batch elements independent -> shard across TCs on v7x.
            dimension_semantics=("parallel",)),
    )(context_len, q_bf, k_bf, wq, wk, norm_bias, v_norm)

    return jnp.transpose(ctx_bf, (1, 0, 2)), jnp.transpose(sc_bf, (1, 0, 2))


# ----------------------------------------------------------------------------
# Full decoder forward (dropout p=0 -> identity; hidden=None -> zeros;
# inference=False -> hidden repackaging returns None; math='fp32' -> no
# vocab padding in the classifier).
# ----------------------------------------------------------------------------
def decoder_forward(params, inputs, enc_context, enc_len):
    """inputs: (T, B) int32 token ids; enc_context: (Tk, B, H); enc_len: (B,)."""
    T, B = inputs.shape
    H = params["embedding"].shape[1]

    # Embedding gather (glue; padding_idx row is zero in the table).
    x = jnp.take(params["embedding"], inputs, axis=0)          # (T, B, H)

    # --- att_rnn: LSTM(H -> H); input projection hoisted out of recurrence.
    g0 = fused_matmul([x.reshape(T * B, H)], [params["att_wih"]],
                      params["att_b"]).reshape(T, B, 4 * H)
    x = lstm_recurrent(g0, params["att_whh"])

    # --- normalized Bahdanau attention over encoder context.
    attn, scores = bahdanau_attention(
        x, enc_context, enc_len,
        params["attn_wq"], params["attn_wk"], params["attn_norm_bias"],
        params["attn_v"], params["attn_norm_scalar"])

    a2d = attn.reshape(T * B, H)

    # --- first residual-free LSTM layer on [x ; attn]; concat fused into the
    # gate matmul via the split W_ih halves.
    g = fused_matmul([x.reshape(T * B, H), a2d],
                     [params["rnn_wih_x"][0], params["rnn_wih_a"][0]],
                     params["rnn_b"][0]).reshape(T, B, 4 * H)
    x = lstm_recurrent(g, params["rnn_whh"][0])

    # --- remaining LSTM layers with residual connections (residual add fused
    # into the recurrent kernel's output store).
    n_rnn = len(params["rnn_whh"])
    for i in range(1, n_rnn):
        residual = x
        g = fused_matmul([x.reshape(T * B, H), a2d],
                         [params["rnn_wih_x"][i], params["rnn_wih_a"][i]],
                         params["rnn_b"][i]).reshape(T, B, 4 * H)
        x = lstm_recurrent(g, params["rnn_whh"][i], residual=residual)

    # --- classifier (tiled Linear).
    V = params["cls_w"].shape[1]
    logits = fused_matmul([x.reshape(T * B, H)], [params["cls_w"]],
                          params["cls_b"]).reshape(T, B, V)

    # package_hidden() returns None when inference=False.
    return logits, scores, [enc_context, enc_len, None]


# ----------------------------------------------------------------------------
# Deterministic synthetic parameters (weights stored bf16 for the MXU,
# biases / attention vectors kept f32).
# ----------------------------------------------------------------------------
def make_params(key, vocab_size, hidden_size, num_layers):
    H = hidden_size
    n_rnn = num_layers - 1
    keys = jax.random.split(key, 12 + n_rnn)
    s = 0.1
    bf16 = jnp.bfloat16

    emb = s * jax.random.normal(keys[0], (vocab_size, H), jnp.float32)
    emb = emb.at[0].set(0.0)  # padding_idx = 0

    rnn_wih_x, rnn_wih_a, rnn_whh, rnn_b = [], [], [], []
    for i in range(n_rnn):
        lk = jax.random.split(keys[12 + i], 4)
        rnn_wih_x.append((s * jax.random.normal(lk[0], (H, 4 * H))).astype(bf16))
        rnn_wih_a.append((s * jax.random.normal(lk[1], (H, 4 * H))).astype(bf16))
        rnn_whh.append((s * jax.random.normal(lk[2], (H, 4 * H))).astype(bf16))
        rnn_b.append(s * jax.random.normal(lk[3], (1, 4 * H), jnp.float32))

    params = {
        "embedding": emb,
        # att_rnn LSTM (input H)
        "att_wih": (s * jax.random.normal(keys[1], (H, 4 * H))).astype(bf16),
        "att_whh": (s * jax.random.normal(keys[2], (H, 4 * H))).astype(bf16),
        "att_b": s * jax.random.normal(keys[3], (1, 4 * H), jnp.float32),
        # normalized Bahdanau attention
        "attn_wq": (s * jax.random.normal(keys[4], (H, H))).astype(bf16),
        "attn_wk": (s * jax.random.normal(keys[5], (H, H))).astype(bf16),
        "attn_norm_bias": jnp.zeros((1, H), jnp.float32),
        "attn_v": s * jax.random.normal(keys[6], (1, H), jnp.float32),
        "attn_norm_scalar": jnp.full((1, 1), 1.0 / (H ** 0.5), jnp.float32),
        # (num_layers - 1) LSTM layers with input [x ; attn]; W_ih stored
        # pre-split so the concat never materializes.
        "rnn_wih_x": rnn_wih_x,
        "rnn_wih_a": rnn_wih_a,
        "rnn_whh": rnn_whh,
        "rnn_b": rnn_b,
        # classifier
        "cls_w": (s * jax.random.normal(keys[10], (H, vocab_size))).astype(bf16),
        "cls_b": s * jax.random.normal(keys[11], (1, vocab_size), jnp.float32),
    }
    return params


if __name__ == "__main__":
    vocab_size = 64
    hidden_size = 32
    num_layers = 4      # att_rnn + 3 residual LSTM layers
    seq_q = 4           # decoder sequence length
    seq_k = 6           # encoder sequence length
    batch = 2

    key = jax.random.PRNGKey(0)
    k_tok, k_ctx, k_par = jax.random.split(key, 3)

    inputs = jax.random.randint(k_tok, (seq_q, batch), 1, vocab_size,
                                dtype=jnp.int32)
    enc_context = jax.random.normal(k_ctx, (seq_k, batch, hidden_size),
                                    jnp.float32)
    enc_len = jnp.array([6, 4], dtype=jnp.int32)

    params = make_params(k_par, vocab_size, hidden_size, num_layers)

    fwd = jax.jit(decoder_forward)
    logits, scores, new_ctx = fwd(params, inputs, enc_context, enc_len)
    jax.block_until_ready(logits)
    jax.block_until_ready(scores)

    assert logits.shape == (seq_q, batch, vocab_size)
    assert scores.shape == (seq_q, batch, seq_k)
    assert bool(jnp.all(jnp.isfinite(logits)))
    # attention weights beyond context_len must be ~0 and rows sum to 1
    assert bool(jnp.all(scores[:, 1, 4:] < 1e-6))
    assert bool(jnp.allclose(jnp.sum(scores, axis=-1), 1.0, atol=1e-4))

    print("KERNEL_OK")
</pallas_src>

<mosaic_0001>
module attributes {stable_mosaic.version = 11 : i64} {
  func.func @_lstm_recurrent_kernel(%arg0: i32, %arg1: memref<4x2x128xf32, #tpu.memory_space<vmem>>, %arg2: memref<32x128xbf16, #tpu.memory_space<vmem>>, %arg3: memref<4x2x32xf32, #tpu.memory_space<vmem>>, %arg4: memref<2x32xf32, #tpu.memory_space<vmem>>, %arg5: memref<2x32xf32, #tpu.memory_space<vmem>>) attributes {dimension_semantics = [#tpu.dimension_semantics<arbitrary>], iteration_bounds = array<i64: 1>, scalar_prefetch = 0 : i64, scratch_operands = 2 : i64, tpu.core_type = #tpu.core_type<tc>, window_params = [{transform_indices = @transform_0, window_bounds = array<i64: 4, 2, 128>}, {pipeline_mode = #tpu.pipeline_mode<synchronous>, transform_indices = @transform_1, window_bounds = array<i64: 32, 128>}, {transform_indices = @transform_2, window_bounds = array<i64: 4, 2, 32>}]} {
    %c0_i32 = arith.constant 0 : i32
    %0 = arith.cmpi eq, %arg0, %c0_i32 : i32
    %1 = arith.extui %0 : i1 to i32
    %c0_i32_0 = arith.constant 0 : i32
    %2 = arith.cmpi ne, %1, %c0_i32_0 : i32
    scf.if %2 {
      %cst_72 = arith.constant 0.000000e+00 : f32
      %163 = vector.broadcast %cst_72 : f32 to vector<2x32xf32>
      %c0_73 = arith.constant 0 : index
      %c0_74 = arith.constant 0 : index
      %164 = vector.load %arg4[%c0_73, %c0_74] : memref<2x32xf32, #tpu.memory_space<vmem>>, vector<2x32xf32>
      tpu.vector_store %arg4[%c0_73, %c0_74], %163 {strides = array<i32>} : memref<2x32xf32, #tpu.memory_space<vmem>>, vector<2x32xf32>,
      %cst_75 = arith.constant 0.000000e+00 : f32
      %165 = vector.broadcast %cst_75 : f32 to vector<2x32xf32>
      %c0_76 = arith.constant 0 : index
      %c0_77 = arith.constant 0 : index
      %166 = vector.load %arg5[%c0_76, %c0_77] : memref<2x32xf32, #tpu.memory_space<vmem>>, vector<2x32xf32>
      tpu.vector_store %arg5[%c0_76, %c0_77], %165 {strides = array<i32>} : memref<2x32xf32, #tpu.memory_space<vmem>>, vector<2x32xf32>,
    } else {
    }
    %c0_i32_1 = arith.constant 0 : i32
    %3 = arith.index_cast %c0_i32_1 : i32 to index
    %c0 = arith.constant 0 : index
    %c0_2 = arith.constant 0 : index
    %4 = vector.load %arg1[%3, %c0, %c0_2] : memref<4x2x128xf32, #tpu.memory_space<vmem>>, vector<1x2x128xf32>
    %5 = vector.shape_cast %4 : vector<1x2x128xf32> to vector<2x128xf32>
    %c0_3 = arith.constant 0 : index
    %c0_4 = arith.constant 0 : index
    %6 = vector.load %arg4[%c0_3, %c0_4] : memref<2x32xf32, #tpu.memory_space<vmem>>, vector<2x32xf32>
    %7 = arith.truncf %6 : vector<2x32xf32> to vector<2x32xbf16>
    %c0_5 = arith.constant 0 : index
    %c0_6 = arith.constant 0 : index
    %8 = vector.load %arg2[%c0_5, %c0_6] : memref<32x128xbf16, #tpu.memory_space<vmem>>, vector<32x128xbf16>
    %cst = arith.constant dense<0.000000e+00> : vector<2x128xf32>
    %9 = tpu.matmul %7, %8, %cst {dimension_numbers = #tpu.dot_dimension_numbers<[1], [0], [0], [1], [0, 0, 1, 1], [], []>} : vector<2x32xbf16>, vector<32x128xbf16>, vector<2x128xf32> -> vector<2x128xf32>
    %10 = arith.addf %5, %9 : vector<2x128xf32>
    %11 = vector.extract_strided_slice %10 {offsets = [0, 0], sizes = [2, 32], strides = [1, 1]} : vector<2x128xf32> to vector<2x32xf32>
    %12 = arith.negf %11 : vector<2x32xf32>
    %13 = math.exp %12 : vector<2x32xf32>
    %cst_7 = arith.constant 1.000000e+00 : f32
    %14 = vector.broadcast %cst_7 : f32 to vector<2x32xf32>
    %15 = arith.addf %14, %13 : vector<2x32xf32>
    %16 = arith.divf %14, %15 : vector<2x32xf32>
    %17 = vector.extract_strided_slice %10 {offsets = [0, 32], sizes = [2, 32], strides = [1, 1]} : vector<2x128xf32> to vector<2x32xf32>
    %18 = arith.negf %17 : vector<2x32xf32>
    %19 = math.exp %18 : vector<2x32xf32>
    %cst_8 = arith.constant 1.000000e+00 : f32
    %20 = vector.broadcast %cst_8 : f32 to vector<2x32xf32>
    %21 = arith.addf %20, %19 : vector<2x32xf32>
    %22 = arith.divf %20, %21 : vector<2x32xf32>
    %23 = vector.extract_strided_slice %10 {offsets = [0, 64], sizes = [2, 32], strides = [1, 1]} : vector<2x128xf32> to vector<2x32xf32>
    %24 = math.tanh %23 : vector<2x32xf32>
    %25 = vector.extract_strided_slice %10 {offsets = [0, 96], sizes = [2, 32], strides = [1, 1]} : vector<2x128xf32> to vector<2x32xf32>
    %26 = arith.negf %25 : vector<2x32xf32>
    %27 = math.exp %26 : vector<2x32xf32>
    %cst_9 = arith.constant 1.000000e+00 : f32
    %28 = vector.broadcast %cst_9 : f32 to vector<2x32xf32>
    %29 = arith.addf %28, %27 : vector<2x32xf32>
    %30 = arith.divf %28, %29 : vector<2x32xf32>
    %c0_10 = arith.constant 0 : index
    %c0_11 = arith.constant 0 : index
    %31 = vector.load %arg5[%c0_10, %c0_11] : memref<2x32xf32, #tpu.memory_space<vmem>>, vector<2x32xf32>
    %32 = arith.mulf %22, %31 : vector<2x32xf32>
    %33 = arith.mulf %16, %24 : vector<2x32xf32>
    %34 = arith.addf %32, %33 : vector<2x32xf32>
    %35 = math.tanh %34 : vector<2x32xf32>
    %36 = arith.mulf %30, %35 : vector<2x32xf32>
    %c0_12 = arith.constant 0 : index
    %c0_13 = arith.constant 0 : index
    %37 = vector.load %arg5[%c0_12, %c0_13] : memref<2x32xf32, #tpu.memory_space<vmem>>, vector<2x32xf32>
    tpu.vector_store %arg5[%c0_12, %c0_13], %34 {strides = array<i32>} : memref<2x32xf32, #tpu.memory_space<vmem>>, vector<2x32xf32>,
    %c0_14 = arith.constant 0 : index
    %c0_15 = arith.constant 0 : index
    %38 = vector.load %arg4[%c0_14, %c0_15] : memref<2x32xf32, #tpu.memory_space<vmem>>, vector<2x32xf32>
    tpu.vector_store %arg4[%c0_14, %c0_15], %36 {strides = array<i32>} : memref<2x32xf32, #tpu.memory_space<vmem>>, vector<2x32xf32>,
    %39 = arith.index_cast %c0_i32_1 : i32 to index
    %c0_16 = arith.constant 0 : index
    %c0_17 = arith.constant 0 : index
    %40 = vector.load %arg3[%39, %c0_16, %c0_17] : memref<4x2x32xf32, #tpu.memory_space<vmem>>, vector<1x2x32xf32>
    %41 = vector.shape_cast %40 : vector<1x2x32xf32> to vector<2x32xf32>
    %42 = vector.shape_cast %36 : vector<2x32xf32> to vector<1x2x32xf32>
    tpu.vector_store %arg3[%39, %c0_16, %c0_17], %42 {strides = array<i32>} : memref<4x2x32xf32, #tpu.memory_space<vmem>>, vector<1x2x32xf32>,
    %c1_i32 = arith.constant 1 : i32
    %43 = arith.index_cast %c1_i32 : i32 to index
    %c0_18 = arith.constant 0 : index
    %c0_19 = arith.constant 0 : index
    %44 = vector.load %arg1[%43, %c0_18, %c0_19] : memref<4x2x128xf32, #tpu.memory_space<vmem>>, vector<1x2x128xf32>
    %45 = vector.shape_cast %44 : vector<1x2x128xf32> to vector<2x128xf32>
    %c0_20 = arith.constant 0 : index
    %c0_21 = arith.constant 0 : index
    %46 = vector.load %arg4[%c0_20, %c0_21] : memref<2x32xf32, #tpu.memory_space<vmem>>, vector<2x32xf32>
    %47 = arith.truncf %46 : vector<2x32xf32> to vector<2x32xbf16>
    %c0_22 = arith.constant 0 : index
    %c0_23 = arith.constant 0 : index
    %48 = vector.load %arg2[%c0_22, %c0_23] : memref<32x128xbf16, #tpu.memory_space<vmem>>, vector<32x128xbf16>
    %cst_24 = arith.constant dense<0.000000e+00> : vector<2x128xf32>
    %49 = tpu.matmul %47, %48, %cst_24 {dimension_numbers = #tpu.dot_dimension_numbers<[1], [0], [0], [1], [0, 0, 1, 1], [], []>} : vector<2x32xbf16>, vector<32x128xbf16>, vector<2x128xf32> -> vector<2x128xf32>
    %50 = arith.addf %45, %49 : vector<2x128xf32>
    %51 = vector.extract_strided_slice %50 {offsets = [0, 0], sizes = [2, 32], strides = [1, 1]} : vector<2x128xf32> to vector<2x32xf32>
    %52 = arith.negf %51 : vector<2x32xf32>
    %53 = math.exp %52 : vector<2x32xf32>
    %cst_25 = arith.constant 1.000000e+00 : f32
    %54 = vector.broadcast %cst_25 : f32 to vector<2x32xf32>
    %55 = arith.addf %54, %53 : vector<2x32xf32>
    %56 = arith.divf %54, %55 : vector<2x32xf32>
    %57 = vector.extract_strided_slice %50 {offsets = [0, 32], sizes = [2, 32], strides = [1, 1]} : vector<2x128xf32> to vector<2x32xf32>
    %58 = arith.negf %57 : vector<2x32xf32>
    %59 = math.exp %58 : vector<2x32xf32>
    %cst_26 = arith.constant 1.000000e+00 : f32
    %60 = vector.broadcast %cst_26 : f32 to vector<2x32xf32>
    %61 = arith.addf %60, %59 : vector<2x32xf32>
    %62 = arith.divf %60, %61 : vector<2x32xf32>
    %63 = vector.extract_strided_slice %50 {offsets = [0, 64], sizes = [2, 32], strides = [1, 1]} : vector<2x128xf32> to vector<2x32xf32>
    %64 = math.tanh %63 : vector<2x32xf32>
    %65 = vector.extract_strided_slice %50 {offsets = [0, 96], sizes = [2, 32], strides = [1, 1]} : vector<2x128xf32> to vector<2x32xf32>
    %66 = arith.negf %65 : vector<2x32xf32>
    %67 = math.exp %66 : vector<2x32xf32>
    %cst_27 = arith.constant 1.000000e+00 : f32
    %68 = vector.broadcast %cst_27 : f32 to vector<2x32xf32>
    %69 = arith.addf %68, %67 : vector<2x32xf32>
    %70 = arith.divf %68, %69 : vector<2x32xf32>
    %c0_28 = arith.constant 0 : index
    %c0_29 = arith.constant 0 : index
    %71 = vector.load %arg5[%c0_28, %c0_29] : memref<2x32xf32, #tpu.memory_space<vmem>>, vector<2x32xf32>
    %72 = arith.mulf %62, %71 : vector<2x32xf32>
    %73 = arith.mulf %56, %64 : vector<2x32xf32>
    %74 = arith.addf %72, %73 : vector<2x32xf32>
    %75 = math.tanh %74 : vector<2x32xf32>
    %76 = arith.mulf %70, %75 : vector<2x32xf32>
    %c0_30 = arith.constant 0 : index
    %c0_31 = arith.constant 0 : index
    %77 = vector.load %arg5[%c0_30, %c0_31] : memref<2x32xf32, #tpu.memory_space<vmem>>, vector<2x32xf32>
    tpu.vector_store %arg5[%c0_30, %c0_31], %74 {strides = array<i32>} : memref<2x32xf32, #tpu.memory_space<vmem>>, vector<2x32xf32>,
    %c0_32 = arith.constant 0 : index
    %c0_33 = arith.constant 0 : index
    %78 = vector.load %arg4[%c0_32, %c0_33] : memref<2x32xf32, #tpu.memory_space<vmem>>, vector<2x32xf32>
    tpu.vector_store %arg4[%c0_32, %c0_33], %76 {strides = array<i32>} : memref<2x32xf32, #tpu.memory_space<vmem>>, vector<2x32xf32>,
    %79 = arith.index_cast %c1_i32 : i32 to index
    %c0_34 = arith.constant 0 : index
    %c0_35 = arith.constant 0 : index
    %80 = vector.load %arg3[%79, %c0_34, %c0_35] : memref<4x2x32xf32, #tpu.memory_space<vmem>>, vector<1x2x32xf32>
    %81 = vector.shape_cast %80 : vector<1x2x32xf32> to vector<2x32xf32>
    %82 = vector.shape_cast %76 : vector<2x32xf32> to vector<1x2x32xf32>
    tpu.vector_store %arg3[%79, %c0_34, %c0_35], %82 {strides = array<i32>} : memref<4x2x32xf32, #tpu.memory_space<vmem>>, vector<1x2x32xf32>,
    %c2_i32 = arith.constant 2 : i32
    %83 = arith.index_cast %c2_i32 : i32 to index
    %c0_36 = arith.constant 0 : index
    %c0_37 = arith.constant 0 : index
    %84 = vector.load %arg1[%83, %c0_36, %c0_37] : memref<4x2x128xf32, #tpu.memory_space<vmem>>, vector<1x2x128xf32>
    %85 = vector.shape_cast %84 : vector<1x2x128xf32> to vector<2x128xf32>
    %c0_38 = arith.constant 0 : index
    %c0_39 = arith.constant 0 : index
    %86 = vector.load %arg4[%c0_38, %c0_39] : memref<2x32xf32, #tpu.memory_space<vmem>>, vector<2x32xf32>
    %87 = arith.truncf %86 : vector<2x32xf32> to vector<2x32xbf16>
    %c0_40 = arith.constant 0 : index
    %c0_41 = arith.constant 0 : index
    %88 = vector.load %arg2[%c0_40, %c0_41] : memref<32x128xbf16, #tpu.memory_space<vmem>>, vector<32x128xbf16>
    %cst_42 = arith.constant dense<0.000000e+00> : vector<2x128xf32>
    %89 = tpu.matmul %87, %88, %cst_42 {dimension_numbers = #tpu.dot_dimension_numbers<[1], [0], [0], [1], [0, 0, 1, 1], [], []>} : vector<2x32xbf16>, vector<32x128xbf16>, vector<2x128xf32> -> vector<2x128xf32>
    %90 = arith.addf %85, %89 : vector<2x128xf32>
    %91 = vector.extract_strided_slice %90 {offsets = [0, 0], sizes = [2, 32], strides = [1, 1]} : vector<2x128xf32> to vector<2x32xf32>
    %92 = arith.negf %91 : vector<2x32xf32>
    %93 = math.exp %92 : vector<2x32xf32>
    %cst_43 = arith.constant 1.000000e+00 : f32
    %94 = vector.broadcast %cst_43 : f32 to vector<2x32xf32>
    %95 = arith.addf %94, %93 : vector<2x32xf32>
    %96 = arith.divf %94, %95 : vector<2x32xf32>
    %97 = vector.extract_strided_slice %90 {offsets = [0, 32], sizes = [2, 32], strides = [1, 1]} : vector<2x128xf32> to vector<2x32xf32>
    %98 = arith.negf %97 : vector<2x32xf32>
    %99 = math.exp %98 : vector<2x32xf32>
    %cst_44 = arith.constant 1.000000e+00 : f32
    %100 = vector.broadcast %cst_44 : f32 to vector<2x32xf32>
    %101 = arith.addf %100, %99 : vector<2x32xf32>
    %102 = arith.divf %100, %101 : vector<2x32xf32>
    %103 = vector.extract_strided_slice %90 {offsets = [0, 64], sizes = [2, 32], strides = [1, 1]} : vector<2x128xf32> to vector<2x32xf32>
    %104 = math.tanh %103 : vector<2x32xf32>
    %105 = vector.extract_strided_slice %90 {offsets = [0, 96], sizes = [2, 32], strides = [1, 1]} : vector<2x128xf32> to vector<2x32xf32>
    %106 = arith.negf %105 : vector<2x32xf32>
    %107 = math.exp %106 : vector<2x32xf32>
    %cst_45 = arith.constant 1.000000e+00 : f32
    %108 = vector.broadcast %cst_45 : f32 to vector<2x32xf32>
    %109 = arith.addf %108, %107 : vector<2x32xf32>
    %110 = arith.divf %108, %109 : vector<2x32xf32>
    %c0_46 = arith.constant 0 : index
    %c0_47 = arith.constant 0 : index
    %111 = vector.load %arg5[%c0_46, %c0_47] : memref<2x32xf32, #tpu.memory_space<vmem>>, vector<2x32xf32>
    %112 = arith.mulf %102, %111 : vector<2x32xf32>
    %113 = arith.mulf %96, %104 : vector<2x32xf32>
    %114 = arith.addf %112, %113 : vector<2x32xf32>
    %115 = math.tanh %114 : vector<2x32xf32>
    %116 = arith.mulf %110, %115 : vector<2x32xf32>
    %c0_48 = arith.constant 0 : index
    %c0_49 = arith.constant 0 : index
    %117 = vector.load %arg5[%c0_48, %c0_49] : memref<2x32xf32, #tpu.memory_space<vmem>>, vector<2x32xf32>
    tpu.vector_store %arg5[%c0_48, %c0_49], %114 {strides = array<i32>} : memref<2x32xf32, #tpu.memory_space<vmem>>, vector<2x32xf32>,
    %c0_50 = arith.constant 0 : index
    %c0_51 = arith.constant 0 : index
    %118 = vector.load %arg4[%c0_50, %c0_51] : memref<2x32xf32, #tpu.memory_space<vmem>>, vector<2x32xf32>
    tpu.vector_store %arg4[%c0_50, %c0_51], %116 {strides = array<i32>} : memref<2x32xf32, #tpu.memory_space<vmem>>, vector<2x32xf32>,
    %119 = arith.index_cast %c2_i32 : i32 to index
    %c0_52 = arith.constant 0 : index
    %c0_53 = arith.constant 0 : index
    %120 = vector.load %arg3[%119, %c0_52, %c0_53] : memref<4x2x32xf32, #tpu.memory_space<vmem>>, vector<1x2x32xf32>
    %121 = vector.shape_cast %120 : vector<1x2x32xf32> to vector<2x32xf32>
    %122 = vector.shape_cast %116 : vector<2x32xf32> to vector<1x2x32xf32>
    tpu.vector_store %arg3[%119, %c0_52, %c0_53], %122 {strides = array<i32>} : memref<4x2x32xf32, #tpu.memory_space<vmem>>, vector<1x2x32xf32>,
    %c3_i32 = arith.constant 3 : i32
    %123 = arith.index_cast %c3_i32 : i32 to index
    %c0_54 = arith.constant 0 : index
    %c0_55 = arith.constant 0 : index
    %124 = vector.load %arg1[%123, %c0_54, %c0_55] : memref<4x2x128xf32, #tpu.memory_space<vmem>>, vector<1x2x128xf32>
    %125 = vector.shape_cast %124 : vector<1x2x128xf32> to vector<2x128xf32>
    %c0_56 = arith.constant 0 : index
    %c0_57 = arith.constant 0 : index
    %126 = vector.load %arg4[%c0_56, %c0_57] : memref<2x32xf32, #tpu.memory_space<vmem>>, vector<2x32xf32>
    %127 = arith.truncf %126 : vector<2x32xf32> to vector<2x32xbf16>
    %c0_58 = arith.constant 0 : index
    %c0_59 = arith.constant 0 : index
    %128 = vector.load %arg2[%c0_58, %c0_59] : memref<32x128xbf16, #tpu.memory_space<vmem>>, vector<32x128xbf16>
    %cst_60 = arith.constant dense<0.000000e+00> : vector<2x128xf32>
    %129 = tpu.matmul %127, %128, %cst_60 {dimension_numbers = #tpu.dot_dimension_numbers<[1], [0], [0], [1], [0, 0, 1, 1], [], []>} : vector<2x32xbf16>, vector<32x128xbf16>, vector<2x128xf32> -> vector<2x128xf32>
    %130 = arith.addf %125, %129 : vector<2x128xf32>
    %131 = vector.extract_strided_slice %130 {offsets = [0, 0], sizes = [2, 32], strides = [1, 1]} : vector<2x128xf32> to vector<2x32xf32>
    %132 = arith.negf %131 : vector<2x32xf32>
    %133 = math.exp %132 : vector<2x32xf32>
    %cst_61 = arith.constant 1.000000e+00 : f32
    %134 = vector.broadcast %cst_61 : f32 to vector<2x32xf32>
    %135 = arith.addf %134, %133 : vector<2x32xf32>
    %136 = arith.divf %134, %135 : vector<2x32xf32>
    %137 = vector.extract_strided_slice %130 {offsets = [0, 32], sizes = [2, 32], strides = [1, 1]} : vector<2x128xf32> to vector<2x32xf32>
    %138 = arith.negf %137 : vector<2x32xf32>
    %139 = math.exp %138 : vector<2x32xf32>
    %cst_62 = arith.constant 1.000000e+00 : f32
    %140 = vector.broadcast %cst_62 : f32 to vector<2x32xf32>
    %141 = arith.addf %140, %139 : vector<2x32xf32>
    %142 = arith.divf %140, %141 : vector<2x32xf32>
    %143 = vector.extract_strided_slice %130 {offsets = [0, 64], sizes = [2, 32], strides = [1, 1]} : vector<2x128xf32> to vector<2x32xf32>
    %144 = math.tanh %143 : vector<2x32xf32>
    %145 = vector.extract_strided_slice %130 {offsets = [0, 96], sizes = [2, 32], strides = [1, 1]} : vector<2x128xf32> to vector<2x32xf32>
    %146 = arith.negf %145 : vector<2x32xf32>
    %147 = math.exp %146 : vector<2x32xf32>
    %cst_63 = arith.constant 1.000000e+00 : f32
    %148 = vector.broadcast %cst_63 : f32 to vector<2x32xf32>
    %149 = arith.addf %148, %147 : vector<2x32xf32>
    %150 = arith.divf %148, %149 : vector<2x32xf32>
    %c0_64 = arith.constant 0 : index
    %c0_65 = arith.constant 0 : index
    %151 = vector.load %arg5[%c0_64, %c0_65] : memref<2x32xf32, #tpu.memory_space<vmem>>, vector<2x32xf32>
    %152 = arith.mulf %142, %151 : vector<2x32xf32>
    %153 = arith.mulf %136, %144 : vector<2x32xf32>
    %154 = arith.addf %152, %153 : vector<2x32xf32>
    %155 = math.tanh %154 : vector<2x32xf32>
    %156 = arith.mulf %150, %155 : vector<2x32xf32>
    %c0_66 = arith.constant 0 : index
    %c0_67 = arith.constant 0 : index
    %157 = vector.load %arg5[%c0_66, %c0_67] : memref<2x32xf32, #tpu.memory_space<vmem>>, vector<2x32xf32>
    tpu.vector_store %arg5[%c0_66, %c0_67], %154 {strides = array<i32>} : memref<2x32xf32, #tpu.memory_space<vmem>>, vector<2x32xf32>,
    %c0_68 = arith.constant 0 : index
    %c0_69 = arith.constant 0 : index
    %158 = vector.load %arg4[%c0_68, %c0_69] : memref<2x32xf32, #tpu.memory_space<vmem>>, vector<2x32xf32>
    tpu.vector_store %arg4[%c0_68, %c0_69], %156 {strides = array<i32>} : memref<2x32xf32, #tpu.memory_space<vmem>>, vector<2x32xf32>,
    %159 = arith.index_cast %c3_i32 : i32 to index
    %c0_70 = arith.constant 0 : index
    %c0_71 = arith.constant 0 : index
    %160 = vector.load %arg3[%159, %c0_70, %c0_71] : memref<4x2x32xf32, #tpu.memory_space<vmem>>, vector<1x2x32xf32>
    %161 = vector.shape_cast %160 : vector<1x2x32xf32> to vector<2x32xf32>
    %162 = vector.shape_cast %156 : vector<2x32xf32> to vector<1x2x32xf32>
    tpu.vector_store %arg3[%159, %c0_70, %c0_71], %162 {strides = array<i32>} : memref<4x2x32xf32, #tpu.memory_space<vmem>>, vector<1x2x32xf32>,
    %c4_i32 = arith.constant 4 : i32
    return
  }
  func.func @transform_0(%arg0: i32) -> (i32, i32, i32) {
    %c0_i32 = arith.constant 0 : i32
    %c0_i32_0 = arith.constant 0 : i32
    %c0_i32_1 = arith.constant 0 : i32
    return %arg0, %c0_i32, %c0_i32_0 : i32, i32, i32
  }
  func.func @transform_1(%arg0: i32) -> (i32, i32) {
    %c0_i32 = arith.constant 0 : i32
    %c0_i32_0 = arith.constant 0 : i32
    %c0_i32_1 = arith.constant 0 : i32
    return %c0_i32, %c0_i32_0 : i32, i32
  }
  func.func @transform_2(%arg0: i32) -> (i32, i32, i32) {
    %c0_i32 = arith.constant 0 : i32
    %c0_i32_0 = arith.constant 0 : i32
    %c0_i32_1 = arith.constant 0 : i32
    return %arg0, %c0_i32, %c0_i32_0 : i32, i32, i32
  }
}

module attributes {stable_mosaic.version = 11 : i64} {
  func.func @_fused_matmul_kernel(%arg0: i32, %arg1: i32, %arg2: i32, %arg3: memref<8x32xf32, #tpu.memory_space<vmem>>, %arg4: memref<8x32xf32, #tpu.memory_space<vmem>>, %arg5: memref<32x128xbf16, #tpu.memory_space<vmem>>, %arg6: memref<32x128xbf16, #tpu.memory_space<vmem>>, %arg7: memref<1x128xf32, #tpu.memory_space<vmem>>, %arg8: memref<8x128xf32, #tpu.memory_space<vmem>>, %arg9: memref<8x128xf32, #tpu.memory_space<vmem>>) attributes {dimension_semantics = [#tpu.dimension_semantics<parallel>, #tpu.dimension_semantics<parallel>, #tpu.dimension_semantics<arbitrary>], iteration_bounds = array<i64: 1, 1, 1>, scalar_prefetch = 0 : i64, scratch_operands = 1 : i64, tpu.core_type = #tpu.core_type<tc>, window_params = [{transform_indices = @transform_0, window_bounds = array<i64: 8, 32>}, {transform_indices = @transform_1, window_bounds = array<i64: 8, 32>}, {transform_indices = @transform_2, window_bounds = array<i64: 32, 128>}, {transform_indices = @transform_3, window_bounds = array<i64: 32, 128>}, {transform_indices = @transform_4, window_bounds = array<i64: 1, 128>}, {transform_indices = @transform_5, window_bounds = array<i64: 8, 128>}]} {
    %c0_i32 = arith.constant 0 : i32
    %0 = arith.cmpi eq, %arg2, %c0_i32 : i32
    %1 = arith.extui %0 : i1 to i32
    %c0_i32_0 = arith.constant 0 : i32
    %2 = arith.cmpi ne, %1, %c0_i32_0 : i32
    scf.if %2 {
      %cst_15 = arith.constant 0.000000e+00 : f32
      %18 = vector.broadcast %cst_15 : f32 to vector<8x128xf32>
      %c0_16 = arith.constant 0 : index
      %c0_17 = arith.constant 0 : index
      %19 = vector.load %arg9[%c0_16, %c0_17] : memref<8x128xf32, #tpu.memory_space<vmem>>, vector<8x128xf32>
      tpu.vector_store %arg9[%c0_16, %c0_17], %18 {strides = array<i32>} : memref<8x128xf32, #tpu.memory_space<vmem>>, vector<8x128xf32>,
    } else {
    }
    %c0 = arith.constant 0 : index
    %c0_1 = arith.constant 0 : index
    %3 = vector.load %arg9[%c0, %c0_1] : memref<8x128xf32, #tpu.memory_space<vmem>>, vector<8x128xf32>
    %c0_2 = arith.constant 0 : index
    %c0_3 = arith.constant 0 : index
    %4 = vector.load %arg3[%c0_2, %c0_3] : memref<8x32xf32, #tpu.memory_space<vmem>>, vector<8x32xf32>
    %5 = arith.truncf %4 : vector<8x32xf32> to vector<8x32xbf16>
    %c0_4 = arith.constant 0 : index
    %c0_5 = arith.constant 0 : index
    %6 = vector.load %arg5[%c0_4, %c0_5] : memref<32x128xbf16, #tpu.memory_space<vmem>>, vector<32x128xbf16>
    %cst = arith.constant dense<0.000000e+00> : vector<8x128xf32>
    %7 = tpu.matmul %5, %6, %cst {dimension_numbers = #tpu.dot_dimension_numbers<[1], [0], [0], [1], [0, 0, 1, 1], [], []>} : vector<8x32xbf16>, vector<32x128xbf16>, vector<8x128xf32> -> vector<8x128xf32>
    %8 = arith.addf %3, %7 : vector<8x128xf32>
    %c0_6 = arith.constant 0 : index
    %c0_7 = arith.constant 0 : index
    %9 = vector.load %arg4[%c0_6, %c0_7] : memref<8x32xf32, #tpu.memory_space<vmem>>, vector<8x32xf32>
    %10 = arith.truncf %9 : vector<8x32xf32> to vector<8x32xbf16>
    %c0_8 = arith.constant 0 : index
    %c0_9 = arith.constant 0 : index
    %11 = vector.load %arg6[%c0_8, %c0_9] : memref<32x128xbf16, #tpu.memory_space<vmem>>, vector<32x128xbf16>
    %cst_10 = arith.constant dense<0.000000e+00> : vector<8x128xf32>
    %12 = tpu.matmul %10, %11, %cst_10 {dimension_numbers = #tpu.dot_dimension_numbers<[1], [0], [0], [1], [0, 0, 1, 1], [], []>} : vector<8x32xbf16>, vector<32x128xbf16>, vector<8x128xf32> -> vector<8x128xf32>
    %13 = arith.addf %8, %12 : vector<8x128xf32>
    %c0_11 = arith.constant 0 : index
    %c0_12 = arith.constant 0 : index
    %14 = vector.load %arg9[%c0_11, %c0_12] : memref<8x128xf32, #tpu.memory_space<vmem>>, vector<8x128xf32>
    tpu.vector_store %arg9[%c0_11, %c0_12], %13 {strides = array<i32>} : memref<8x128xf32, #tpu.memory_space<vmem>>, vector<8x128xf32>,
    %c0_i32_13 = arith.constant 0 : i32
    %15 = arith.cmpi eq, %arg2, %c0_i32_13 : i32
    %16 = arith.extui %15 : i1 to i32
    %c0_i32_14 = arith.constant 0 : i32
    %17 = arith.cmpi ne, %16, %c0_i32_14 : i32
    scf.if %17 {
      %c0_15 = arith.constant 0 : index
      %c0_16 = arith.constant 0 : index
      %18 = vector.load %arg9[%c0_15, %c0_16] : memref<8x128xf32, #tpu.memory_space<vmem>>, vector<8x128xf32>
      %c0_17 = arith.constant 0 : index
      %c0_18 = arith.constant 0 : index
      %19 = vector.load %arg7[%c0_17, %c0_18] : memref<1x128xf32, #tpu.memory_space<vmem>>, vector<1x128xf32>
      %20 = vector.broadcast %19 : vector<1x128xf32> to vector<8x128xf32>
      %21 = arith.addf %18, %20 : vector<8x128xf32>
      %c0_19 = arith.constant 0 : index
      %c0_20 = arith.constant 0 : index
      %22 = vector.load %arg8[%c0_19, %c0_20] : memref<8x128xf32, #tpu.memory_space<vmem>>, vector<8x128xf32>
      tpu.vector_store %arg8[%c0_19, %c0_20], %21 {strides = array<i32>} : memref<8x128xf32, #tpu.memory_space<vmem>>, vector<8x128xf32>,
    } else {
    }
    return
  }
  func.func @transform_0(%arg0: i32, %arg1: i32, %arg2: i32) -> (i32, i32) {
    %c0_i32 = arith.constant 0 : i32
    %c0_i32_0 = arith.constant 0 : i32
    return %arg0, %c0_i32 : i32, i32
  }
  func.func @transform_1(%arg0: i32, %arg1: i32, %arg2: i32) -> (i32, i32) {
    %c0_i32 = arith.constant 0 : i32
    %c0_i32_0 = arith.constant 0 : i32
    return %arg0, %c0_i32 : i32, i32
  }
  func.func @transform_2(%arg0: i32, %arg1: i32, %arg2: i32) -> (i32, i32) {
    %c0_i32 = arith.constant 0 : i32
    %c0_i32_0 = arith.constant 0 : i32
    return %c0_i32, %arg1 : i32, i32
  }
  func.func @transform_3(%arg0: i32, %arg1: i32, %arg2: i32) -> (i32, i32) {
    %c0_i32 = arith.constant 0 : i32
    %c0_i32_0 = arith.constant 0 : i32
    return %c0_i32, %arg1 : i32, i32
  }
  func.func @transform_4(%arg0: i32, %arg1: i32, %arg2: i32) -> (i32, i32) {
    %c0_i32 = arith.constant 0 : i32
    %c0_i32_0 = arith.constant 0 : i32
    return %c0_i32, %arg1 : i32, i32
  }
  func.func @transform_5(%arg0: i32, %arg1: i32, %arg2: i32) -> (i32, i32) {
    %c0_i32 = arith.constant 0 : i32
    return %arg0, %arg1 : i32, i32
  }
}

module attributes {stable_mosaic.version = 11 : i64} {
  func.func @_fused_matmul_kernel(%arg0: i32, %arg1: i32, %arg2: i32, %arg3: memref<8x32xf32, #tpu.memory_space<vmem>>, %arg4: memref<32x128xbf16, #tpu.memory_space<vmem>>, %arg5: memref<1x128xf32, #tpu.memory_space<vmem>>, %arg6: memref<8x128xf32, #tpu.memory_space<vmem>>, %arg7: memref<8x128xf32, #tpu.memory_space<vmem>>) attributes {dimension_semantics = [#tpu.dimension_semantics<parallel>, #tpu.dimension_semantics<parallel>, #tpu.dimension_semantics<arbitrary>], iteration_bounds = array<i64: 1, 1, 1>, scalar_prefetch = 0 : i64, scratch_operands = 1 : i64, tpu.core_type = #tpu.core_type<tc>, window_params = [{transform_indices = @transform_0, window_bounds = array<i64: 8, 32>}, {transform_indices = @transform_1, window_bounds = array<i64: 32, 128>}, {transform_indices = @transform_2, window_bounds = array<i64: 1, 128>}, {transform_indices = @transform_3, window_bounds = array<i64: 8, 128>}]} {
    %c0_i32 = arith.constant 0 : i32
    %0 = arith.cmpi eq, %arg2, %c0_i32 : i32
    %1 = arith.extui %0 : i1 to i32
    %c0_i32_0 = arith.constant 0 : i32
    %2 = arith.cmpi ne, %1, %c0_i32_0 : i32
    scf.if %2 {
      %cst_10 = arith.constant 0.000000e+00 : f32
      %13 = vector.broadcast %cst_10 : f32 to vector<8x128xf32>
      %c0_11 = arith.constant 0 : index
      %c0_12 = arith.constant 0 : index
      %14 = vector.load %arg7[%c0_11, %c0_12] : memref<8x128xf32, #tpu.memory_space<vmem>>, vector<8x128xf32>
      tpu.vector_store %arg7[%c0_11, %c0_12], %13 {strides = array<i32>} : memref<8x128xf32, #tpu.memory_space<vmem>>, vector<8x128xf32>,
    } else {
    }
    %c0 = arith.constant 0 : index
    %c0_1 = arith.constant 0 : index
    %3 = vector.load %arg7[%c0, %c0_1] : memref<8x128xf32, #tpu.memory_space<vmem>>, vector<8x128xf32>
    %c0_2 = arith.constant 0 : index
    %c0_3 = arith.constant 0 : index
    %4 = vector.load %arg3[%c0_2, %c0_3] : memref<8x32xf32, #tpu.memory_space<vmem>>, vector<8x32xf32>
    %5 = arith.truncf %4 : vector<8x32xf32> to vector<8x32xbf16>
    %c0_4 = arith.constant 0 : index
    %c0_5 = arith.constant 0 : index
    %6 = vector.load %arg4[%c0_4, %c0_5] : memref<32x128xbf16, #tpu.memory_space<vmem>>, vector<32x128xbf16>
    %cst = arith.constant dense<0.000000e+00> : vector<8x128xf32>
    %7 = tpu.matmul %5, %6, %cst {dimension_numbers = #tpu.dot_dimension_numbers<[1], [0], [0], [1], [0, 0, 1, 1], [], []>} : vector<8x32xbf16>, vector<32x128xbf16>, vector<8x128xf32> -> vector<8x128xf32>
    %8 = arith.addf %3, %7 : vector<8x128xf32>
    %c0_6 = arith.constant 0 : index
    %c0_7 = arith.constant 0 : index
    %9 = vector.load %arg7[%c0_6, %c0_7] : memref<8x128xf32, #tpu.memory_space<vmem>>, vector<8x128xf32>
    tpu.vector_store %arg7[%c0_6, %c0_7], %8 {strides = array<i32>} : memref<8x128xf32, #tpu.memory_space<vmem>>, vector<8x128xf32>,
    %c0_i32_8 = arith.constant 0 : i32
    %10 = arith.cmpi eq, %arg2, %c0_i32_8 : i32
    %11 = arith.extui %10 : i1 to i32
    %c0_i32_9 = arith.constant 0 : i32
    %12 = arith.cmpi ne, %11, %c0_i32_9 : i32
    scf.if %12 {
      %c0_10 = arith.constant 0 : index
      %c0_11 = arith.constant 0 : index
      %13 = vector.load %arg7[%c0_10, %c0_11] : memref<8x128xf32, #tpu.memory_space<vmem>>, vector<8x128xf32>
      %c0_12 = arith.constant 0 : index
      %c0_13 = arith.constant 0 : index
      %14 = vector.load %arg5[%c0_12, %c0_13] : memref<1x128xf32, #tpu.memory_space<vmem>>, vector<1x128xf32>
      %15 = vector.broadcast %14 : vector<1x128xf32> to vector<8x128xf32>
      %16 = arith.addf %13, %15 : vector<8x128xf32>
      %c0_14 = arith.constant 0 : index
      %c0_15 = arith.constant 0 : index
      %17 = vector.load %arg6[%c0_14, %c0_15] : memref<8x128xf32, #tpu.memory_space<vmem>>, vector<8x128xf32>
      tpu.vector_store %arg6[%c0_14, %c0_15], %16 {strides = array<i32>} : memref<8x128xf32, #tpu.memory_space<vmem>>, vector<8x128xf32>,
    } else {
    }
    return
  }
  func.func @transform_0(%arg0: i32, %arg1: i32, %arg2: i32) -> (i32, i32) {
    %c0_i32 = arith.constant 0 : i32
    %c0_i32_0 = arith.constant 0 : i32
    return %arg0, %c0_i32 : i32, i32
  }
  func.func @transform_1(%arg0: i32, %arg1: i32, %arg2: i32) -> (i32, i32) {
    %c0_i32 = arith.constant 0 : i32
    %c0_i32_0 = arith.constant 0 : i32
    return %c0_i32, %arg1 : i32, i32
  }
  func.func @transform_2(%arg0: i32, %arg1: i32, %arg2: i32) -> (i32, i32) {
    %c0_i32 = arith.constant 0 : i32
    %c0_i32_0 = arith.constant 0 : i32
    return %c0_i32, %arg1 : i32, i32
  }
  func.func @transform_3(%arg0: i32, %arg1: i32, %arg2: i32) -> (i32, i32) {
    %c0_i32 = arith.constant 0 : i32
    return %arg0, %arg1 : i32, i32
  }
}

module attributes {stable_mosaic.version = 11 : i64} {
  func.func @_attn_kernel(%arg0: i32, %arg1: memref<2xi32, #tpu.memory_space<smem>>, %arg2: memref<1x4x32xf32, #tpu.memory_space<vmem>>, %arg3: memref<1x6x32xf32, #tpu.memory_space<vmem>>, %arg4: memref<32x32xbf16, #tpu.memory_space<vmem>>, %arg5: memref<32x32xbf16, #tpu.memory_space<vmem>>, %arg6: memref<1x32xf32, #tpu.memory_space<vmem>>, %arg7: memref<1x32xf32, #tpu.memory_space<vmem>>, %arg8: memref<1x4x32xf32, #tpu.memory_space<vmem>>, %arg9: memref<1x4x6xf32, #tpu.memory_space<vmem>>) attributes {dimension_semantics = [#tpu.dimension_semantics<parallel>], iteration_bounds = array<i64: 2>, scalar_prefetch = 1 : i64, scratch_operands = 0 : i64, tpu.core_type = #tpu.core_type<tc>, window_params = [{transform_indices = @transform_0, window_bounds = array<i64: 1, 4, 32>}, {transform_indices = @transform_1, window_bounds = array<i64: 1, 6, 32>}, {pipeline_mode = #tpu.pipeline_mode<synchronous>, transform_indices = @transform_2, window_bounds = array<i64: 32, 32>}, {pipeline_mode = #tpu.pipeline_mode<synchronous>, transform_indices = @transform_3, window_bounds = array<i64: 32, 32>}, {pipeline_mode = #tpu.pipeline_mode<synchronous>, transform_indices = @transform_4, window_bounds = array<i64: 1, 32>}, {pipeline_mode = #tpu.pipeline_mode<synchronous>, transform_indices = @transform_5, window_bounds = array<i64: 1, 32>}, {transform_indices = @transform_6, window_bounds = array<i64: 1, 4, 32>}, {transform_indices = @transform_7, window_bounds = array<i64: 1, 4, 6>}]} {
    %c0 = arith.constant 0 : index
    %c0_0 = arith.constant 0 : index
    %c0_1 = arith.constant 0 : index
    %0 = vector.load %arg2[%c0, %c0_0, %c0_1] : memref<1x4x32xf32, #tpu.memory_space<vmem>>, vector<1x4x32xf32>
    %1 = vector.shape_cast %0 : vector<1x4x32xf32> to vector<4x32xf32>
    %2 = arith.truncf %1 : vector<4x32xf32> to vector<4x32xbf16>
    %c0_2 = arith.constant 0 : index
    %c0_3 = arith.constant 0 : index
    %c0_4 = arith.constant 0 : index
    %3 = vector.load %arg3[%c0_2, %c0_3, %c0_4] : memref<1x6x32xf32, #tpu.memory_space<vmem>>, vector<1x6x32xf32>
    %4 = vector.shape_cast %3 : vector<1x6x32xf32> to vector<6x32xf32>
    %5 = arith.truncf %4 : vector<6x32xf32> to vector<6x32xbf16>
    %c0_5 = arith.constant 0 : index
    %c0_6 = arith.constant 0 : index
    %6 = vector.load %arg4[%c0_5, %c0_6] : memref<32x32xbf16, #tpu.memory_space<vmem>>, vector<32x32xbf16>
    %cst = arith.constant dense<0.000000e+00> : vector<4x32xf32>
    %7 = tpu.matmul %2, %6, %cst {dimension_numbers = #tpu.dot_dimension_numbers<[1], [0], [0], [1], [0, 0, 1, 1], [], []>} : vector<4x32xbf16>, vector<32x32xbf16>, vector<4x32xf32> -> vector<4x32xf32>
    %c0_7 = arith.constant 0 : index
    %c0_8 = arith.constant 0 : index
    %8 = vector.load %arg5[%c0_7, %c0_8] : memref<32x32xbf16, #tpu.memory_space<vmem>>, vector<32x32xbf16>
    %cst_9 = arith.constant dense<0.000000e+00> : vector<6x32xf32>
    %9 = tpu.matmul %5, %8, %cst_9 {dimension_numbers = #tpu.dot_dimension_numbers<[1], [0], [0], [1], [0, 0, 1, 1], [], []>} : vector<6x32xbf16>, vector<32x32xbf16>, vector<6x32xf32> -> vector<6x32xf32>
    %10 = vector.shape_cast %7 : vector<4x32xf32> to vector<4x1x32xf32>
    %11 = vector.shape_cast %9 : vector<6x32xf32> to vector<1x6x32xf32>
    %12 = vector.broadcast %10 : vector<4x1x32xf32> to vector<4x6x32xf32>
    %13 = vector.broadcast %11 : vector<1x6x32xf32> to vector<4x6x32xf32>
    %14 = arith.addf %12, %13 : vector<4x6x32xf32>
    %c0_10 = arith.constant 0 : index
    %c0_11 = arith.constant 0 : index
    %15 = vector.load %arg6[%c0_10, %c0_11] : memref<1x32xf32, #tpu.memory_space<vmem>>, vector<1x32xf32>
    %16 = vector.shape_cast %15 : vector<1x32xf32> to vector<1x1x32xf32>
    %17 = vector.broadcast %16 : vector<1x1x32xf32> to vector<4x6x32xf32>
    %18 = arith.addf %14, %17 : vector<4x6x32xf32>
    %19 = math.tanh %18 : vector<4x6x32xf32>
    %c0_12 = arith.constant 0 : index
    %c0_13 = arith.constant 0 : index
    %20 = vector.load %arg7[%c0_12, %c0_13] : memref<1x32xf32, #tpu.memory_space<vmem>>, vector<1x32xf32>
    %21 = vector.shape_cast %20 : vector<1x32xf32> to vector<1x1x32xf32>
    %22 = vector.broadcast %21 : vector<1x1x32xf32> to vector<4x6x32xf32>
    %23 = arith.mulf %19, %22 : vector<4x6x32xf32>
    %cst_14 = arith.constant dense<0.000000e+00> : vector<4x6xf32>
    %24 = vector.multi_reduction <add>, %23, %cst_14 [2] : vector<4x6x32xf32> to vector<4x6xf32>
    %25 = arith.index_cast %arg0 : i32 to index
    %26 = memref.load %arg1[%25] : memref<2xi32, #tpu.memory_space<smem>>
    %27 = tpu.iota {dimensions = array<i32: 1>} : vector<4x6xi32>
    %28 = vector.broadcast %26 : i32 to vector<4x6xi32>
    %29 = arith.cmpi sge, %27, %28 : vector<4x6xi32>
    %cst_15 = arith.constant -6.550400e+04 : f32
    %30 = vector.broadcast %cst_15 : f32 to vector<4x6xf32>
    %31 = arith.select %29, %30, %24 : vector<4x6xi1>, vector<4x6xf32>
    %cst_16 = arith.constant dense<0xFF800000> : vector<4xf32>
    %32 = vector.multi_reduction <maximumf>, %31, %cst_16 [1] : vector<4x6xf32> to vector<4xf32>
    %33 = vector.shape_cast %32 : vector<4xf32> to vector<4x1xf32>
    %34 = vector.broadcast %33 : vector<4x1xf32> to vector<4x6xf32>
    %35 = arith.subf %31, %34 : vector<4x6xf32>
    %36 = math.exp %35 : vector<4x6xf32>
    %cst_17 = arith.constant dense<0.000000e+00> : vector<4xf32>
    %37 = vector.multi_reduction <add>, %36, %cst_17 [1] : vector<4x6xf32> to vector<4xf32>
    %38 = vector.shape_cast %37 : vector<4xf32> to vector<4x1xf32>
    %39 = tpu.reciprocal %38 : vector<4x1xf32> -> vector<4x1xf32>
    %40 = vector.broadcast %39 : vector<4x1xf32> to vector<4x6xf32>
    %41 = arith.mulf %36, %40 : vector<4x6xf32>
    %42 = arith.truncf %41 : vector<4x6xf32> to vector<4x6xbf16>
    %cst_18 = arith.constant dense<0.000000e+00> : vector<4x32xf32>
    %43 = tpu.matmul %42, %5, %cst_18 {dimension_numbers = #tpu.dot_dimension_numbers<[1], [0], [0], [1], [0, 0, 1, 1], [], []>} : vector<4x6xbf16>, vector<6x32xbf16>, vector<4x32xf32> -> vector<4x32xf32>
    %c0_19 = arith.constant 0 : index
    %c0_20 = arith.constant 0 : index
    %c0_21 = arith.constant 0 : index
    %44 = vector.load %arg8[%c0_19, %c0_20, %c0_21] : memref<1x4x32xf32, #tpu.memory_space<vmem>>, vector<1x4x32xf32>
    %45 = vector.shape_cast %44 : vector<1x4x32xf32> to vector<4x32xf32>
    %46 = vector.shape_cast %43 : vector<4x32xf32> to vector<1x4x32xf32>
    tpu.vector_store %arg8[%c0_19, %c0_20, %c0_21], %46 {strides = array<i32>} : memref<1x4x32xf32, #tpu.memory_space<vmem>>, vector<1x4x32xf32>,
    %c0_22 = arith.constant 0 : index
    %c0_23 = arith.constant 0 : index
    %c0_24 = arith.constant 0 : index
    %47 = vector.load %arg9[%c0_22, %c0_23, %c0_24] : memref<1x4x6xf32, #tpu.memory_space<vmem>>, vector<1x4x6xf32>
    %48 = vector.shape_cast %47 : vector<1x4x6xf32> to vector<4x6xf32>
    %49 = vector.shape_cast %41 : vector<4x6xf32> to vector<1x4x6xf32>
    tpu.vector_store %arg9[%c0_22, %c0_23, %c0_24], %49 {strides = array<i32>} : memref<1x4x6xf32, #tpu.memory_space<vmem>>, vector<1x4x6xf32>,
    return
  }
  func.func @transform_0(%arg0: i32, %arg1: memref<2xi32, #tpu.memory_space<smem>>) -> (i32, i32, i32) {
    %c0_i32 = arith.constant 0 : i32
    %c0_i32_0 = arith.constant 0 : i32
    %c0_i32_1 = arith.constant 0 : i32
    return %arg0, %c0_i32, %c0_i32_0 : i32, i32, i32
  }
  func.func @transform_1(%arg0: i32, %arg1: memref<2xi32, #tpu.memory_space<smem>>) -> (i32, i32, i32) {
    %c0_i32 = arith.constant 0 : i32
    %c0_i32_0 = arith.constant 0 : i32
    %c0_i32_1 = arith.constant 0 : i32
    return %arg0, %c0_i32, %c0_i32_0 : i32, i32, i32
  }
  func.func @transform_2(%arg0: i32, %arg1: memref<2xi32, #tpu.memory_space<smem>>) -> (i32, i32) {
    %c0_i32 = arith.constant 0 : i32
    %c0_i32_0 = arith.constant 0 : i32
    %c0_i32_1 = arith.constant 0 : i32
    return %c0_i32, %c0_i32_0 : i32, i32
  }
  func.func @transform_3(%arg0: i32, %arg1: memref<2xi32, #tpu.memory_space<smem>>) -> (i32, i32) {
    %c0_i32 = arith.constant 0 : i32
    %c0_i32_0 = arith.constant 0 : i32
    %c0_i32_1 = arith.constant 0 : i32
    return %c0_i32, %c0_i32_0 : i32, i32
  }
  func.func @transform_4(%arg0: i32, %arg1: memref<2xi32, #tpu.memory_space<smem>>) -> (i32, i32) {
    %c0_i32 = arith.constant 0 : i32
    %c0_i32_0 = arith.constant 0 : i32
    %c0_i32_1 = arith.constant 0 : i32
    return %c0_i32, %c0_i32_0 : i32, i32
  }
  func.func @transform_5(%arg0: i32, %arg1: memref<2xi32, #tpu.memory_space<smem>>) -> (i32, i32) {
    %c0_i32 = arith.constant 0 : i32
    %c0_i32_0 = arith.constant 0 : i32
    %c0_i32_1 = arith.constant 0 : i32
    return %c0_i32, %c0_i32_0 : i32, i32
  }
  func.func @transform_6(%arg0: i32, %arg1: memref<2xi32, #tpu.memory_space<smem>>) -> (i32, i32, i32) {
    %c0_i32 = arith.constant 0 : i32
    %c0_i32_0 = arith.constant 0 : i32
    %c0_i32_1 = arith.constant 0 : i32
    return %arg0, %c0_i32, %c0_i32_0 : i32, i32, i32
  }
  func.func @transform_7(%arg0: i32, %arg1: memref<2xi32, #tpu.memory_space<smem>>) -> (i32, i32, i32) {
    %c0_i32 = arith.constant 0 : i32
    %c0_i32_0 = arith.constant 0 : i32
    %c0_i32_1 = arith.constant 0 : i32
    return %arg0, %c0_i32, %c0_i32_0 : i32, i32, i32
  }
}

module attributes {stable_mosaic.version = 11 : i64} {
  func.func @_lstm_recurrent_kernel(%arg0: i32, %arg1: memref<4x2x128xf32, #tpu.memory_space<vmem>>, %arg2: memref<32x128xbf16, #tpu.memory_space<vmem>>, %arg3: memref<4x2x32xf32, #tpu.memory_space<vmem>>, %arg4: memref<4x2x32xf32, #tpu.memory_space<vmem>>, %arg5: memref<2x32xf32, #tpu.memory_space<vmem>>, %arg6: memref<2x32xf32, #tpu.memory_space<vmem>>) attributes {dimension_semantics = [#tpu.dimension_semantics<arbitrary>], iteration_bounds = array<i64: 1>, scalar_prefetch = 0 : i64, scratch_operands = 2 : i64, tpu.core_type = #tpu.core_type<tc>, window_params = [{transform_indices = @transform_0, window_bounds = array<i64: 4, 2, 128>}, {pipeline_mode = #tpu.pipeline_mode<synchronous>, transform_indices = @transform_1, window_bounds = array<i64: 32, 128>}, {transform_indices = @transform_2, window_bounds = array<i64: 4, 2, 32>}, {transform_indices = @transform_3, window_bounds = array<i64: 4, 2, 32>}]} {
    %c0_i32 = arith.constant 0 : i32
    %0 = arith.cmpi eq, %arg0, %c0_i32 : i32
    %1 = arith.extui %0 : i1 to i32
    %c0_i32_0 = arith.constant 0 : i32
    %2 = arith.cmpi ne, %1, %c0_i32_0 : i32
    scf.if %2 {
      %cst_80 = arith.constant 0.000000e+00 : f32
      %179 = vector.broadcast %cst_80 : f32 to vector<2x32xf32>
      %c0_81 = arith.constant 0 : index
      %c0_82 = arith.constant 0 : index
      %180 = vector.load %arg5[%c0_81, %c0_82] : memref<2x32xf32, #tpu.memory_space<vmem>>, vector<2x32xf32>
      tpu.vector_store %arg5[%c0_81, %c0_82], %179 {strides = array<i32>} : memref<2x32xf32, #tpu.memory_space<vmem>>, vector<2x32xf32>,
      %cst_83 = arith.constant 0.000000e+00 : f32
      %181 = vector.broadcast %cst_83 : f32 to vector<2x32xf32>
      %c0_84 = arith.constant 0 : index
      %c0_85 = arith.constant 0 : index
      %182 = vector.load %arg6[%c0_84, %c0_85] : memref<2x32xf32, #tpu.memory_space<vmem>>, vector<2x32xf32>
      tpu.vector_store %arg6[%c0_84, %c0_85], %181 {strides = array<i32>} : memref<2x32xf32, #tpu.memory_space<vmem>>, vector<2x32xf32>,
    } else {
    }
    %c0_i32_1 = arith.constant 0 : i32
    %3 = arith.index_cast %c0_i32_1 : i32 to index
    %c0 = arith.constant 0 : index
    %c0_2 = arith.constant 0 : index
    %4 = vector.load %arg1[%3, %c0, %c0_2] : memref<4x2x128xf32, #tpu.memory_space<vmem>>, vector<1x2x128xf32>
    %5 = vector.shape_cast %4 : vector<1x2x128xf32> to vector<2x128xf32>
    %c0_3 = arith.constant 0 : index
    %c0_4 = arith.constant 0 : index
    %6 = vector.load %arg5[%c0_3, %c0_4] : memref<2x32xf32, #tpu.memory_space<vmem>>, vector<2x32xf32>
    %7 = arith.truncf %6 : vector<2x32xf32> to vector<2x32xbf16>
    %c0_5 = arith.constant 0 : index
    %c0_6 = arith.constant 0 : index
    %8 = vector.load %arg2[%c0_5, %c0_6] : memref<32x128xbf16, #tpu.memory_space<vmem>>, vector<32x128xbf16>
    %cst = arith.constant dense<0.000000e+00> : vector<2x128xf32>
    %9 = tpu.matmul %7, %8, %cst {dimension_numbers = #tpu.dot_dimension_numbers<[1], [0], [0], [1], [0, 0, 1, 1], [], []>} : vector<2x32xbf16>, vector<32x128xbf16>, vector<2x128xf32> -> vector<2x128xf32>
    %10 = arith.addf %5, %9 : vector<2x128xf32>
    %11 = vector.extract_strided_slice %10 {offsets = [0, 0], sizes = [2, 32], strides = [1, 1]} : vector<2x128xf32> to vector<2x32xf32>
    %12 = arith.negf %11 : vector<2x32xf32>
    %13 = math.exp %12 : vector<2x32xf32>
    %cst_7 = arith.constant 1.000000e+00 : f32
    %14 = vector.broadcast %cst_7 : f32 to vector<2x32xf32>
    %15 = arith.addf %14, %13 : vector<2x32xf32>
    %16 = arith.divf %14, %15 : vector<2x32xf32>
    %17 = vector.extract_strided_slice %10 {offsets = [0, 32], sizes = [2, 32], strides = [1, 1]} : vector<2x128xf32> to vector<2x32xf32>
    %18 = arith.negf %17 : vector<2x32xf32>
    %19 = math.exp %18 : vector<2x32xf32>
    %cst_8 = arith.constant 1.000000e+00 : f32
    %20 = vector.broadcast %cst_8 : f32 to vector<2x32xf32>
    %21 = arith.addf %20, %19 : vector<2x32xf32>
    %22 = arith.divf %20, %21 : vector<2x32xf32>
    %23 = vector.extract_strided_slice %10 {offsets = [0, 64], sizes = [2, 32], strides = [1, 1]} : vector<2x128xf32> to vector<2x32xf32>
    %24 = math.tanh %23 : vector<2x32xf32>
    %25 = vector.extract_strided_slice %10 {offsets = [0, 96], sizes = [2, 32], strides = [1, 1]} : vector<2x128xf32> to vector<2x32xf32>
    %26 = arith.negf %25 : vector<2x32xf32>
    %27 = math.exp %26 : vector<2x32xf32>
    %cst_9 = arith.constant 1.000000e+00 : f32
    %28 = vector.broadcast %cst_9 : f32 to vector<2x32xf32>
    %29 = arith.addf %28, %27 : vector<2x32xf32>
    %30 = arith.divf %28, %29 : vector<2x32xf32>
    %c0_10 = arith.constant 0 : index
    %c0_11 = arith.constant 0 : index
    %31 = vector.load %arg6[%c0_10, %c0_11] : memref<2x32xf32, #tpu.memory_space<vmem>>, vector<2x32xf32>
    %32 = arith.mulf %22, %31 : vector<2x32xf32>
    %33 = arith.mulf %16, %24 : vector<2x32xf32>
    %34 = arith.addf %32, %33 : vector<2x32xf32>
    %35 = math.tanh %34 : vector<2x32xf32>
    %36 = arith.mulf %30, %35 : vector<2x32xf32>
    %c0_12 = arith.constant 0 : index
    %c0_13 = arith.constant 0 : index
    %37 = vector.load %arg6[%c0_12, %c0_13] : memref<2x32xf32, #tpu.memory_space<vmem>>, vector<2x32xf32>
    tpu.vector_store %arg6[%c0_12, %c0_13], %34 {strides = array<i32>} : memref<2x32xf32, #tpu.memory_space<vmem>>, vector<2x32xf32>,
    %c0_14 = arith.constant 0 : index
    %c0_15 = arith.constant 0 : index
    %38 = vector.load %arg5[%c0_14, %c0_15] : memref<2x32xf32, #tpu.memory_space<vmem>>, vector<2x32xf32>
    tpu.vector_store %arg5[%c0_14, %c0_15], %36 {strides = array<i32>} : memref<2x32xf32, #tpu.memory_space<vmem>>, vector<2x32xf32>,
    %39 = arith.index_cast %c0_i32_1 : i32 to index
    %c0_16 = arith.constant 0 : index
    %c0_17 = arith.constant 0 : index
    %40 = vector.load %arg3[%39, %c0_16, %c0_17] : memref<4x2x32xf32, #tpu.memory_space<vmem>>, vector<1x2x32xf32>
    %41 = vector.shape_cast %40 : vector<1x2x32xf32> to vector<2x32xf32>
    %42 = arith.addf %36, %41 : vector<2x32xf32>
    %43 = arith.index_cast %c0_i32_1 : i32 to index
    %c0_18 = arith.constant 0 : index
    %c0_19 = arith.constant 0 : index
    %44 = vector.load %arg4[%43, %c0_18, %c0_19] : memref<4x2x32xf32, #tpu.memory_space<vmem>>, vector<1x2x32xf32>
    %45 = vector.shape_cast %44 : vector<1x2x32xf32> to vector<2x32xf32>
    %46 = vector.shape_cast %42 : vector<2x32xf32> to vector<1x2x32xf32>
    tpu.vector_store %arg4[%43, %c0_18, %c0_19], %46 {strides = array<i32>} : memref<4x2x32xf32, #tpu.memory_space<vmem>>, vector<1x2x32xf32>,
    %c1_i32 = arith.constant 1 : i32
    %47 = arith.index_cast %c1_i32 : i32 to index
    %c0_20 = arith.constant 0 : index
    %c0_21 = arith.constant 0 : index
    %48 = vector.load %arg1[%47, %c0_20, %c0_21] : memref<4x2x128xf32, #tpu.memory_space<vmem>>, vector<1x2x128xf32>
    %49 = vector.shape_cast %48 : vector<1x2x128xf32> to vector<2x128xf32>
    %c0_22 = arith.constant 0 : index
    %c0_23 = arith.constant 0 : index
    %50 = vector.load %arg5[%c0_22, %c0_23] : memref<2x32xf32, #tpu.memory_space<vmem>>, vector<2x32xf32>
    %51 = arith.truncf %50 : vector<2x32xf32> to vector<2x32xbf16>
    %c0_24 = arith.constant 0 : index
    %c0_25 = arith.constant 0 : index
    %52 = vector.load %arg2[%c0_24, %c0_25] : memref<32x128xbf16, #tpu.memory_space<vmem>>, vector<32x128xbf16>
    %cst_26 = arith.constant dense<0.000000e+00> : vector<2x128xf32>
    %53 = tpu.matmul %51, %52, %cst_26 {dimension_numbers = #tpu.dot_dimension_numbers<[1], [0], [0], [1], [0, 0, 1, 1], [], []>} : vector<2x32xbf16>, vector<32x128xbf16>, vector<2x128xf32> -> vector<2x128xf32>
    %54 = arith.addf %49, %53 : vector<2x128xf32>
    %55 = vector.extract_strided_slice %54 {offsets = [0, 0], sizes = [2, 32], strides = [1, 1]} : vector<2x128xf32> to vector<2x32xf32>
    %56 = arith.negf %55 : vector<2x32xf32>
    %57 = math.exp %56 : vector<2x32xf32>
    %cst_27 = arith.constant 1.000000e+00 : f32
    %58 = vector.broadcast %cst_27 : f32 to vector<2x32xf32>
    %59 = arith.addf %58, %57 : vector<2x32xf32>
    %60 = arith.divf %58, %59 : vector<2x32xf32>
    %61 = vector.extract_strided_slice %54 {offsets = [0, 32], sizes = [2, 32], strides = [1, 1]} : vector<2x128xf32> to vector<2x32xf32>
    %62 = arith.negf %61 : vector<2x32xf32>
    %63 = math.exp %62 : vector<2x32xf32>
    %cst_28 = arith.constant 1.000000e+00 : f32
    %64 = vector.broadcast %cst_28 : f32 to vector<2x32xf32>
    %65 = arith.addf %64, %63 : vector<2x32xf32>
    %66 = arith.divf %64, %65 : vector<2x32xf32>
    %67 = vector.extract_strided_slice %54 {offsets = [0, 64], sizes = [2, 32], strides = [1, 1]} : vector<2x128xf32> to vector<2x32xf32>
    %68 = math.tanh %67 : vector<2x32xf32>
    %69 = vector.extract_strided_slice %54 {offsets = [0, 96], sizes = [2, 32], strides = [1, 1]} : vector<2x128xf32> to vector<2x32xf32>
    %70 = arith.negf %69 : vector<2x32xf32>
    %71 = math.exp %70 : vector<2x32xf32>
    %cst_29 = arith.constant 1.000000e+00 : f32
    %72 = vector.broadcast %cst_29 : f32 to vector<2x32xf32>
    %73 = arith.addf %72, %71 : vector<2x32xf32>
    %74 = arith.divf %72, %73 : vector<2x32xf32>
    %c0_30 = arith.constant 0 : index
    %c0_31 = arith.constant 0 : index
    %75 = vector.load %arg6[%c0_30, %c0_31] : memref<2x32xf32, #tpu.memory_space<vmem>>, vector<2x32xf32>
    %76 = arith.mulf %66, %75 : vector<2x32xf32>
    %77 = arith.mulf %60, %68 : vector<2x32xf32>
    %78 = arith.addf %76, %77 : vector<2x32xf32>
    %79 = math.tanh %78 : vector<2x32xf32>
    %80 = arith.mulf %74, %79 : vector<2x32xf32>
    %c0_32 = arith.constant 0 : index
    %c0_33 = arith.constant 0 : index
    %81 = vector.load %arg6[%c0_32, %c0_33] : memref<2x32xf32, #tpu.memory_space<vmem>>, vector<2x32xf32>
    tpu.vector_store %arg6[%c0_32, %c0_33], %78 {strides = array<i32>} : memref<2x32xf32, #tpu.memory_space<vmem>>, vector<2x32xf32>,
    %c0_34 = arith.constant 0 : index
    %c0_35 = arith.constant 0 : index
    %82 = vector.load %arg5[%c0_34, %c0_35] : memref<2x32xf32, #tpu.memory_space<vmem>>, vector<2x32xf32>
    tpu.vector_store %arg5[%c0_34, %c0_35], %80 {strides = array<i32>} : memref<2x32xf32, #tpu.memory_space<vmem>>, vector<2x32xf32>,
    %83 = arith.index_cast %c1_i32 : i32 to index
    %c0_36 = arith.constant 0 : index
    %c0_37 = arith.constant 0 : index
    %84 = vector.load %arg3[%83, %c0_36, %c0_37] : memref<4x2x32xf32, #tpu.memory_space<vmem>>, vector<1x2x32xf32>
    %85 = vector.shape_cast %84 : vector<1x2x32xf32> to vector<2x32xf32>
    %86 = arith.addf %80, %85 : vector<2x32xf32>
    %87 = arith.index_cast %c1_i32 : i32 to index
    %c0_38 = arith.constant 0 : index
    %c0_39 = arith.constant 0 : index
    %88 = vector.load %arg4[%87, %c0_38, %c0_39] : memref<4x2x32xf32, #tpu.memory_space<vmem>>, vector<1x2x32xf32>
    %89 = vector.shape_cast %88 : vector<1x2x32xf32> to vector<2x32xf32>
    %90 = vector.shape_cast %86 : vector<2x32xf32> to vector<1x2x32xf32>
    tpu.vector_store %arg4[%87, %c0_38, %c0_39], %90 {strides = array<i32>} : memref<4x2x32xf32, #tpu.memory_space<vmem>>, vector<1x2x32xf32>,
    %c2_i32 = arith.constant 2 : i32
    %91 = arith.index_cast %c2_i32 : i32 to index
    %c0_40 = arith.constant 0 : index
    %c0_41 = arith.constant 0 : index
    %92 = vector.load %arg1[%91, %c0_40, %c0_41] : memref<4x2x128xf32, #tpu.memory_space<vmem>>, vector<1x2x128xf32>
    %93 = vector.shape_cast %92 : vector<1x2x128xf32> to vector<2x128xf32>
    %c0_42 = arith.constant 0 : index
    %c0_43 = arith.constant 0 : index
    %94 = vector.load %arg5[%c0_42, %c0_43] : memref<2x32xf32, #tpu.memory_space<vmem>>, vector<2x32xf32>
    %95 = arith.truncf %94 : vector<2x32xf32> to vector<2x32xbf16>
    %c0_44 = arith.constant 0 : index
    %c0_45 = arith.constant 0 : index
    %96 = vector.load %arg2[%c0_44, %c0_45] : memref<32x128xbf16, #tpu.memory_space<vmem>>, vector<32x128xbf16>
    %cst_46 = arith.constant dense<0.000000e+00> : vector<2x128xf32>
    %97 = tpu.matmul %95, %96, %cst_46 {dimension_numbers = #tpu.dot_dimension_numbers<[1], [0], [0], [1], [0, 0, 1, 1], [], []>} : vector<2x32xbf16>, vector<32x128xbf16>, vector<2x128xf32> -> vector<2x128xf32>
    %98 = arith.addf %93, %97 : vector<2x128xf32>
    %99 = vector.extract_strided_slice %98 {offsets = [0, 0], sizes = [2, 32], strides = [1, 1]} : vector<2x128xf32> to vector<2x32xf32>
    %100 = arith.negf %99 : vector<2x32xf32>
    %101 = math.exp %100 : vector<2x32xf32>
    %cst_47 = arith.constant 1.000000e+00 : f32
    %102 = vector.broadcast %cst_47 : f32 to vector<2x32xf32>
    %103 = arith.addf %102, %101 : vector<2x32xf32>
    %104 = arith.divf %102, %103 : vector<2x32xf32>
    %105 = vector.extract_strided_slice %98 {offsets = [0, 32], sizes = [2, 32], strides = [1, 1]} : vector<2x128xf32> to vector<2x32xf32>
    %106 = arith.negf %105 : vector<2x32xf32>
    %107 = math.exp %106 : vector<2x32xf32>
    %cst_48 = arith.constant 1.000000e+00 : f32
    %108 = vector.broadcast %cst_48 : f32 to vector<2x32xf32>
    %109 = arith.addf %108, %107 : vector<2x32xf32>
    %110 = arith.divf %108, %109 : vector<2x32xf32>
    %111 = vector.extract_strided_slice %98 {offsets = [0, 64], sizes = [2, 32], strides = [1, 1]} : vector<2x128xf32> to vector<2x32xf32>
    %112 = math.tanh %111 : vector<2x32xf32>
    %113 = vector.extract_strided_slice %98 {offsets = [0, 96], sizes = [2, 32], strides = [1, 1]} : vector<2x128xf32> to vector<2x32xf32>
    %114 = arith.negf %113 : vector<2x32xf32>
    %115 = math.exp %114 : vector<2x32xf32>
    %cst_49 = arith.constant 1.000000e+00 : f32
    %116 = vector.broadcast %cst_49 : f32 to vector<2x32xf32>
    %117 = arith.addf %116, %115 : vector<2x32xf32>
    %118 = arith.divf %116, %117 : vector<2x32xf32>
    %c0_50 = arith.constant 0 : index
    %c0_51 = arith.constant 0 : index
    %119 = vector.load %arg6[%c0_50, %c0_51] : memref<2x32xf32, #tpu.memory_space<vmem>>, vector<2x32xf32>
    %120 = arith.mulf %110, %119 : vector<2x32xf32>
    %121 = arith.mulf %104, %112 : vector<2x32xf32>
    %122 = arith.addf %120, %121 : vector<2x32xf32>
    %123 = math.tanh %122 : vector<2x32xf32>
    %124 = arith.mulf %118, %123 : vector<2x32xf32>
    %c0_52 = arith.constant 0 : index
    %c0_53 = arith.constant 0 : index
    %125 = vector.load %arg6[%c0_52, %c0_53] : memref<2x32xf32, #tpu.memory_space<vmem>>, vector<2x32xf32>
    tpu.vector_store %arg6[%c0_52, %c0_53], %122 {strides = array<i32>} : memref<2x32xf32, #tpu.memory_space<vmem>>, vector<2x32xf32>,
    %c0_54 = arith.constant 0 : index
    %c0_55 = arith.constant 0 : index
    %126 = vector.load %arg5[%c0_54, %c0_55] : memref<2x32xf32, #tpu.memory_space<vmem>>, vector<2x32xf32>
    tpu.vector_store %arg5[%c0_54, %c0_55], %124 {strides = array<i32>} : memref<2x32xf32, #tpu.memory_space<vmem>>, vector<2x32xf32>,
    %127 = arith.index_cast %c2_i32 : i32 to index
    %c0_56 = arith.constant 0 : index
    %c0_57 = arith.constant 0 : index
    %128 = vector.load %arg3[%127, %c0_56, %c0_57] : memref<4x2x32xf32, #tpu.memory_space<vmem>>, vector<1x2x32xf32>
    %129 = vector.shape_cast %128 : vector<1x2x32xf32> to vector<2x32xf32>
    %130 = arith.addf %124, %129 : vector<2x32xf32>
    %131 = arith.index_cast %c2_i32 : i32 to index
    %c0_58 = arith.constant 0 : index
    %c0_59 = arith.constant 0 : index
    %132 = vector.load %arg4[%131, %c0_58, %c0_59] : memref<4x2x32xf32, #tpu.memory_space<vmem>>, vector<1x2x32xf32>
    %133 = vector.shape_cast %132 : vector<1x2x32xf32> to vector<2x32xf32>
    %134 = vector.shape_cast %130 : vector<2x32xf32> to vector<1x2x32xf32>
    tpu.vector_store %arg4[%131, %c0_58, %c0_59], %134 {strides = array<i32>} : memref<4x2x32xf32, #tpu.memory_space<vmem>>, vector<1x2x32xf32>,
    %c3_i32 = arith.constant 3 : i32
    %135 = arith.index_cast %c3_i32 : i32 to index
    %c0_60 = arith.constant 0 : index
    %c0_61 = arith.constant 0 : index
    %136 = vector.load %arg1[%135, %c0_60, %c0_61] : memref<4x2x128xf32, #tpu.memory_space<vmem>>, vector<1x2x128xf32>
    %137 = vector.shape_cast %136 : vector<1x2x128xf32> to vector<2x128xf32>
    %c0_62 = arith.constant 0 : index
    %c0_63 = arith.constant 0 : index
    %138 = vector.load %arg5[%c0_62, %c0_63] : memref<2x32xf32, #tpu.memory_space<vmem>>, vector<2x32xf32>
    %139 = arith.truncf %138 : vector<2x32xf32> to vector<2x32xbf16>
    %c0_64 = arith.constant 0 : index
    %c0_65 = arith.constant 0 : index
    %140 = vector.load %arg2[%c0_64, %c0_65] : memref<32x128xbf16, #tpu.memory_space<vmem>>, vector<32x128xbf16>
    %cst_66 = arith.constant dense<0.000000e+00> : vector<2x128xf32>
    %141 = tpu.matmul %139, %140, %cst_66 {dimension_numbers = #tpu.dot_dimension_numbers<[1], [0], [0], [1], [0, 0, 1, 1], [], []>} : vector<2x32xbf16>, vector<32x128xbf16>, vector<2x128xf32> -> vector<2x128xf32>
    %142 = arith.addf %137, %141 : vector<2x128xf32>
    %143 = vector.extract_strided_slice %142 {offsets = [0, 0], sizes = [2, 32], strides = [1, 1]} : vector<2x128xf32> to vector<2x32xf32>
    %144 = arith.negf %143 : vector<2x32xf32>
    %145 = math.exp %144 : vector<2x32xf32>
    %cst_67 = arith.constant 1.000000e+00 : f32
    %146 = vector.broadcast %cst_67 : f32 to vector<2x32xf32>
    %147 = arith.addf %146, %145 : vector<2x32xf32>
    %148 = arith.divf %146, %147 : vector<2x32xf32>
    %149 = vector.extract_strided_slice %142 {offsets = [0, 32], sizes = [2, 32], strides = [1, 1]} : vector<2x128xf32> to vector<2x32xf32>
    %150 = arith.negf %149 : vector<2x32xf32>
    %151 = math.exp %150 : vector<2x32xf32>
    %cst_68 = arith.constant 1.000000e+00 : f32
    %152 = vector.broadcast %cst_68 : f32 to vector<2x32xf32>
    %153 = arith.addf %152, %151 : vector<2x32xf32>
    %154 = arith.divf %152, %153 : vector<2x32xf32>
    %155 = vector.extract_strided_slice %142 {offsets = [0, 64], sizes = [2, 32], strides = [1, 1]} : vector<2x128xf32> to vector<2x32xf32>
    %156 = math.tanh %155 : vector<2x32xf32>
    %157 = vector.extract_strided_slice %142 {offsets = [0, 96], sizes = [2, 32], strides = [1, 1]} : vector<2x128xf32> to vector<2x32xf32>
    %158 = arith.negf %157 : vector<2x32xf32>
    %159 = math.exp %158 : vector<2x32xf32>
    %cst_69 = arith.constant 1.000000e+00 : f32
    %160 = vector.broadcast %cst_69 : f32 to vector<2x32xf32>
    %161 = arith.addf %160, %159 : vector<2x32xf32>
    %162 = arith.divf %160, %161 : vector<2x32xf32>
    %c0_70 = arith.constant 0 : index
    %c0_71 = arith.constant 0 : index
    %163 = vector.load %arg6[%c0_70, %c0_71] : memref<2x32xf32, #tpu.memory_space<vmem>>, vector<2x32xf32>
    %164 = arith.mulf %154, %163 : vector<2x32xf32>
    %165 = arith.mulf %148, %156 : vector<2x32xf32>
    %166 = arith.addf %164, %165 : vector<2x32xf32>
    %167 = math.tanh %166 : vector<2x32xf32>
    %168 = arith.mulf %162, %167 : vector<2x32xf32>
    %c0_72 = arith.constant 0 : index
    %c0_73 = arith.constant 0 : index
    %169 = vector.load %arg6[%c0_72, %c0_73] : memref<2x32xf32, #tpu.memory_space<vmem>>, vector<2x32xf32>
    tpu.vector_store %arg6[%c0_72, %c0_73], %166 {strides = array<i32>} : memref<2x32xf32, #tpu.memory_space<vmem>>, vector<2x32xf32>,
    %c0_74 = arith.constant 0 : index
    %c0_75 = arith.constant 0 : index
    %170 = vector.load %arg5[%c0_74, %c0_75] : memref<2x32xf32, #tpu.memory_space<vmem>>, vector<2x32xf32>
    tpu.vector_store %arg5[%c0_74, %c0_75], %168 {strides = array<i32>} : memref<2x32xf32, #tpu.memory_space<vmem>>, vector<2x32xf32>,
    %171 = arith.index_cast %c3_i32 : i32 to index
    %c0_76 = arith.constant 0 : index
    %c0_77 = arith.constant 0 : index
    %172 = vector.load %arg3[%171, %c0_76, %c0_77] : memref<4x2x32xf32, #tpu.memory_space<vmem>>, vector<1x2x32xf32>
    %173 = vector.shape_cast %172 : vector<1x2x32xf32> to vector<2x32xf32>
    %174 = arith.addf %168, %173 : vector<2x32xf32>
    %175 = arith.index_cast %c3_i32 : i32 to index
    %c0_78 = arith.constant 0 : index
    %c0_79 = arith.constant 0 : index
    %176 = vector.load %arg4[%175, %c0_78, %c0_79] : memref<4x2x32xf32, #tpu.memory_space<vmem>>, vector<1x2x32xf32>
    %177 = vector.shape_cast %176 : vector<1x2x32xf32> to vector<2x32xf32>
    %178 = vector.shape_cast %174 : vector<2x32xf32> to vector<1x2x32xf32>
    tpu.vector_store %arg4[%175, %c0_78, %c0_79], %178 {strides = array<i32>} : memref<4x2x32xf32, #tpu.memory_space<vmem>>, vector<1x2x32xf32>,
    %c4_i32 = arith.constant 4 : i32
    return
  }
  func.func @transform_0(%arg0: i32) -> (i32, i32, i32) {
    %c0_i32 = arith.constant 0 : i32
    %c0_i32_0 = arith.constant 0 : i32
    %c0_i32_1 = arith.constant 0 : i32
    return %arg0, %c0_i32, %c0_i32_0 : i32, i32, i32
  }
  func.func @transform_1(%arg0: i32) -> (i32, i32) {
    %c0_i32 = arith.constant 0 : i32
    %c0_i32_0 = arith.constant 0 : i32
    %c0_i32_1 = arith.constant 0 : i32
    return %c0_i32, %c0_i32_0 : i32, i32
  }
  func.func @transform_2(%arg0: i32) -> (i32, i32, i32) {
    %c0_i32 = arith.constant 0 : i32
    %c0_i32_0 = arith.constant 0 : i32
    %c0_i32_1 = arith.constant 0 : i32
    return %arg0, %c0_i32, %c0_i32_0 : i32, i32, i32
  }
  func.func @transform_3(%arg0: i32) -> (i32, i32, i32) {
    %c0_i32 = arith.constant 0 : i32
    %c0_i32_0 = arith.constant 0 : i32
    %c0_i32_1 = arith.constant 0 : i32
    return %arg0, %c0_i32, %c0_i32_0 : i32, i32, i32
  }
}

module attributes {stable_mosaic.version = 11 : i64} {
  func.func @_fused_matmul_kernel(%arg0: i32, %arg1: i32, %arg2: i32, %arg3: memref<8x32xf32, #tpu.memory_space<vmem>>, %arg4: memref<32x64xbf16, #tpu.memory_space<vmem>>, %arg5: memref<1x64xf32, #tpu.memory_space<vmem>>, %arg6: memref<8x64xf32, #tpu.memory_space<vmem>>, %arg7: memref<8x64xf32, #tpu.memory_space<vmem>>) attributes {dimension_semantics = [#tpu.dimension_semantics<parallel>, #tpu.dimension_semantics<parallel>, #tpu.dimension_semantics<arbitrary>], iteration_bounds = array<i64: 1, 1, 1>, scalar_prefetch = 0 : i64, scratch_operands = 1 : i64, tpu.core_type = #tpu.core_type<tc>, window_params = [{transform_indices = @transform_0, window_bounds = array<i64: 8, 32>}, {transform_indices = @transform_1, window_bounds = array<i64: 32, 64>}, {transform_indices = @transform_2, window_bounds = array<i64: 1, 64>}, {transform_indices = @transform_3, window_bounds = array<i64: 8, 64>}]} {
    %c0_i32 = arith.constant 0 : i32
    %0 = arith.cmpi eq, %arg2, %c0_i32 : i32
    %1 = arith.extui %0 : i1 to i32
    %c0_i32_0 = arith.constant 0 : i32
    %2 = arith.cmpi ne, %1, %c0_i32_0 : i32
    scf.if %2 {
      %cst_10 = arith.constant 0.000000e+00 : f32
      %13 = vector.broadcast %cst_10 : f32 to vector<8x64xf32>
      %c0_11 = arith.constant 0 : index
      %c0_12 = arith.constant 0 : index
      %14 = vector.load %arg7[%c0_11, %c0_12] : memref<8x64xf32, #tpu.memory_space<vmem>>, vector<8x64xf32>
      tpu.vector_store %arg7[%c0_11, %c0_12], %13 {strides = array<i32>} : memref<8x64xf32, #tpu.memory_space<vmem>>, vector<8x64xf32>,
    } else {
    }
    %c0 = arith.constant 0 : index
    %c0_1 = arith.constant 0 : index
    %3 = vector.load %arg7[%c0, %c0_1] : memref<8x64xf32, #tpu.memory_space<vmem>>, vector<8x64xf32>
    %c0_2 = arith.constant 0 : index
    %c0_3 = arith.constant 0 : index
    %4 = vector.load %arg3[%c0_2, %c0_3] : memref<8x32xf32, #tpu.memory_space<vmem>>, vector<8x32xf32>
    %5 = arith.truncf %4 : vector<8x32xf32> to vector<8x32xbf16>
    %c0_4 = arith.constant 0 : index
    %c0_5 = arith.constant 0 : index
    %6 = vector.load %arg4[%c0_4, %c0_5] : memref<32x64xbf16, #tpu.memory_space<vmem>>, vector<32x64xbf16>
    %cst = arith.constant dense<0.000000e+00> : vector<8x64xf32>
    %7 = tpu.matmul %5, %6, %cst {dimension_numbers = #tpu.dot_dimension_numbers<[1], [0], [0], [1], [0, 0, 1, 1], [], []>} : vector<8x32xbf16>, vector<32x64xbf16>, vector<8x64xf32> -> vector<8x64xf32>
    %8 = arith.addf %3, %7 : vector<8x64xf32>
    %c0_6 = arith.constant 0 : index
    %c0_7 = arith.constant 0 : index
    %9 = vector.load %arg7[%c0_6, %c0_7] : memref<8x64xf32, #tpu.memory_space<vmem>>, vector<8x64xf32>
    tpu.vector_store %arg7[%c0_6, %c0_7], %8 {strides = array<i32>} : memref<8x64xf32, #tpu.memory_space<vmem>>, vector<8x64xf32>,
    %c0_i32_8 = arith.constant 0 : i32
    %10 = arith.cmpi eq, %arg2, %c0_i32_8 : i32
    %11 = arith.extui %10 : i1 to i32
    %c0_i32_9 = arith.constant 0 : i32
    %12 = arith.cmpi ne, %11, %c0_i32_9 : i32
    scf.if %12 {
      %c0_10 = arith.constant 0 : index
      %c0_11 = arith.constant 0 : index
      %13 = vector.load %arg7[%c0_10, %c0_11] : memref<8x64xf32, #tpu.memory_space<vmem>>, vector<8x64xf32>
      %c0_12 = arith.constant 0 : index
      %c0_13 = arith.constant 0 : index
      %14 = vector.load %arg5[%c0_12, %c0_13] : memref<1x64xf32, #tpu.memory_space<vmem>>, vector<1x64xf32>
      %15 = vector.broadcast %14 : vector<1x64xf32> to vector<8x64xf32>
      %16 = arith.addf %13, %15 : vector<8x64xf32>
      %c0_14 = arith.constant 0 : index
      %c0_15 = arith.constant 0 : index
      %17 = vector.load %arg6[%c0_14, %c0_15] : memref<8x64xf32, #tpu.memory_space<vmem>>, vector<8x64xf32>
      tpu.vector_store %arg6[%c0_14, %c0_15], %16 {strides = array<i32>} : memref<8x64xf32, #tpu.memory_space<vmem>>, vector<8x64xf32>,
    } else {
    }
    return
  }
  func.func @transform_0(%arg0: i32, %arg1: i32, %arg2: i32) -> (i32, i32) {
    %c0_i32 = arith.constant 0 : i32
    %c0_i32_0 = arith.constant 0 : i32
    return %arg0, %c0_i32 : i32, i32
  }
  func.func @transform_1(%arg0: i32, %arg1: i32, %arg2: i32) -> (i32, i32) {
    %c0_i32 = arith.constant 0 : i32
    %c0_i32_0 = arith.constant 0 : i32
    return %c0_i32, %arg1 : i32, i32
  }
  func.func @transform_2(%arg0: i32, %arg1: i32, %arg2: i32) -> (i32, i32) {
    %c0_i32 = arith.constant 0 : i32
    %c0_i32_0 = arith.constant 0 : i32
    return %c0_i32, %arg1 : i32, i32
  }
  func.func @transform_3(%arg0: i32, %arg1: i32, %arg2: i32) -> (i32, i32) {
    %c0_i32 = arith.constant 0 : i32
    return %arg0, %arg1 : i32, i32
  }
}

</mosaic_0001>

<llo_original>
// kernel: decoder_forward.10
$region0: #{decoder_forward.10}
  #allocation0 [shape = 'u32[]', space=smem, size = 0x4, offset = 0x4, fixed_abs, tag = 'smem constant byte address 0x4 - core index']
  #allocation1 [shape = 'u32[72,128]{1,0:T(1,128)}', space=vmem, size = 0x9000, scoped, tag = 'internal scratch']
  #allocation2 [shape = 'f32[8,128]{1,0:T(8,128)}', space=vmem, size = 0x1000, scoped, tag = 'scratch operand']
  %s0 = inlined_call_operand.vmem [shape: f32[8,32], index: 0, kind: input, shape index: {}]
  %s1 = inlined_call_operand.vmem [shape: bf16[32,128], index: 1, kind: input, shape index: {}]
  %s2 = inlined_call_operand.vmem [shape: f32[1,128], index: 2, kind: input, shape index: {}]
  %s3 = inlined_call_operand.vmem [shape: f32[8,128], index: 3, kind: output, shape index: {}]
  %s4 = sld [smem:[#allocation0]]
  $region30: #{decoder_forward.10} parent=0
    _
  %s6 = ssub.s32 1, %s4
  %s7 = scalar_select 0, %s6, %s4
  // Predicated region
  $region2: #{decoder_forward.10} parent=0 // pred_check
    _
  $region3: #{decoder_forward.10} parent=0 // pred_check_branch
    %9 = sbr.rel (0) target = $region5
  $region4: #{decoder_forward.10} parent=0 // pred_region
    _
  $region5: #{decoder_forward.10} parent=0 // pred_fallthru
    _
  // Predicated region
  $region6: #{decoder_forward.10} parent=0 // pred_check
    _
  $region7: #{decoder_forward.10} parent=0 // pred_check_branch
    %11 = sbr.rel (0) target = $region9
  $region8: #{decoder_forward.10} parent=0 // pred_region
    _
  $region9: #{decoder_forward.10} parent=0 // pred_fallthru
    _
  // Predicated region
  $region10: #{decoder_forward.10} parent=0 // pred_check
    _
  $region11: #{decoder_forward.10} parent=0 // pred_check_branch
    %13 = sbr.rel (0) target = $region13
  $region12: #{decoder_forward.10} parent=0 // pred_region
    _
  $region13: #{decoder_forward.10} parent=0 // pred_fallthru
    _
  %p15 = scmp.eq.s32.totalorder 0, 0
  // Predicated region
  $region14: #{decoder_forward.10} parent=0 // pred_check
    %p16 = pneg %p15
  $region15: #{decoder_forward.10} parent=0 // pred_check_branch
    %18 = sbr.rel (%p16) target = $region17
  $region16: #{decoder_forward.10} parent=0 // pred_region
    %19 = vst [vmem:[#allocation2] sm:$0xff] 0.0
  $region17: #{decoder_forward.10} parent=0 // pred_fallthru
    _
  %v20 = vld [vmem:[#allocation2] sm:$0xff]
  %v21 = vld [vmem:[%s0] sm:$0xff]
  %v22 = vpack.c.bf16 %v21, %v21
  %v23 = vld [vmem:[%s1] sm:$0xf]
  %v24 = vld [vmem:[%s1 + $0x4] sm:$0xf]
  %v25 = vld [vmem:[%s1 + $0x8] sm:$0xf]
  %v26 = vld [vmem:[%s1 + $0xc] sm:$0xf]
  %v31 = vunpack.c.l.b16 %v23
  %v32 = vunpack.c.l.b16 %v24
  %v33 = vunpack.c.l.b16 %v25
  %v34 = vunpack.c.l.b16 %v26
  %v35 = vpack.c.b16 %v32, %v31
  %v36 = vpack.c.b16 %v34, %v33
  %vm39 = vcmask 261120
  %v41 = vsel %vm39, %v22, 0
  %43 = vmatpush.bf16.msra.mxu0 0
  %44 = vmatpush.bf16.msra.mxu0 0
  %45 = vmatpush.bf16.msra.mxu0 0
  %46 = vmatpush.bf16.msra.mxu0 0
  %47 = vmatpush.bf16.msra.mxu0 0
  %48 = vmatpush.bf16.msra.mxu0 0
  %49 = vmatpush.bf16.msra.mxu0 %v36
  %50 = vmatpush.bf16.msra.mxu0 %v35
  %51 = vmatmul.bf16.gmra.mxu0 %v41
  %v52 = vpop.f32.mrf.mxu0
  %v53 = vadd.f32 0.0, %v52
  %v54 = vpop.f32.mrf.mxu0
  %55 = vdwg.mxu0
  %v56 = vadd.f32 %v20, %v53
  %57 = vst [vmem:[#allocation2] sm:$0xff] %v56
  // Predicated region
  $region18: #{decoder_forward.10} parent=0 // pred_check
    %p58 = pneg %p15
  $region19: #{decoder_forward.10} parent=0 // pred_check_branch
    %60 = sbr.rel (%p58) target = $region21
  $region20: #{decoder_forward.10} parent=0 // pred_region
    %v61 = vld [vmem:[#allocation2] sm:$0xff]
    %v62 = vld [vmem:[%s2] sm:$0x1]
    %v64 = vperm.slane %v62, 0
    %v66 = vadd.f32 %v61, %v64
    %67 = vst [vmem:[%s3] sm:$0xff] %v66
  $region21: #{decoder_forward.10} parent=0 // pred_fallthru
    _
  // Predicated region
  $region22: #{decoder_forward.10} parent=0 // pred_check
    _
  $region23: #{decoder_forward.10} parent=0 // pred_check_branch
    %69 = sbr.rel (0) target = $region25
  $region24: #{decoder_forward.10} parent=0 // pred_region
    _
  $region25: #{decoder_forward.10} parent=0 // pred_fallthru
    _
  // Predicated region
  $region26: #{decoder_forward.10} parent=0 // pred_check
    _
  $region27: #{decoder_forward.10} parent=0 // pred_check_branch
    %71 = sbr.rel (0) target = $region29
  $region28: #{decoder_forward.10} parent=0 // pred_region
    _
  $region29: #{decoder_forward.10} parent=0 // pred_fallthru
    _

// kernel: decoder_forward.13
$region0: #{decoder_forward.13}
  #allocation0 [shape = 'u32[]', space=smem, size = 0x4, offset = 0x4, fixed_abs, tag = 'smem constant byte address 0x4 - core index']
  #allocation1 [shape = 'u32[72,128]{1,0:T(1,128)}', space=vmem, size = 0x9000, scoped, tag = 'internal scratch']
  #allocation2 [shape = 'f32[8,128]{1,0:T(8,128)}', space=vmem, size = 0x1000, scoped, tag = 'scratch operand']
  %s0 = inlined_call_operand.vmem [shape: f32[8,32], index: 0, kind: input, shape index: {}]
  %s1 = inlined_call_operand.vmem [shape: f32[8,32], index: 1, kind: input, shape index: {}]
  %s2 = inlined_call_operand.vmem [shape: bf16[32,128], index: 2, kind: input, shape index: {}]
  %s3 = inlined_call_operand.vmem [shape: bf16[32,128], index: 3, kind: input, shape index: {}]
  %s4 = inlined_call_operand.vmem [shape: f32[1,128], index: 4, kind: input, shape index: {}]
  %s5 = inlined_call_operand.vmem [shape: f32[8,128], index: 5, kind: output, shape index: {}]
  %s6 = sld [smem:[#allocation0]]
  $region38: #{decoder_forward.13} parent=0
    _
  %s8 = ssub.s32 1, %s6
  %s9 = scalar_select 0, %s8, %s6
  // Predicated region
  $region2: #{decoder_forward.13} parent=0 // pred_check
    _
  $region3: #{decoder_forward.13} parent=0 // pred_check_branch
    %11 = sbr.rel (0) target = $region5
  $region4: #{decoder_forward.13} parent=0 // pred_region
    _
  $region5: #{decoder_forward.13} parent=0 // pred_fallthru
    _
  // Predicated region
  $region6: #{decoder_forward.13} parent=0 // pred_check
    _
  $region7: #{decoder_forward.13} parent=0 // pred_check_branch
    %13 = sbr.rel (0) target = $region9
  $region8: #{decoder_forward.13} parent=0 // pred_region
    _
  $region9: #{decoder_forward.13} parent=0 // pred_fallthru
    _
  // Predicated region
  $region10: #{decoder_forward.13} parent=0 // pred_check
    _
  $region11: #{decoder_forward.13} parent=0 // pred_check_branch
    %15 = sbr.rel (0) target = $region13
  $region12: #{decoder_forward.13} parent=0 // pred_region
    _
  $region13: #{decoder_forward.13} parent=0 // pred_fallthru
    _
  // Predicated region
  $region14: #{decoder_forward.13} parent=0 // pred_check
    _
  $region15: #{decoder_forward.13} parent=0 // pred_check_branch
    %17 = sbr.rel (0) target = $region17
  $region16: #{decoder_forward.13} parent=0 // pred_region
    _
  $region17: #{decoder_forward.13} parent=0 // pred_fallthru
    _
  // Predicated region
  $region18: #{decoder_forward.13} parent=0 // pred_check
    _
  $region19: #{decoder_forward.13} parent=0 // pred_check_branch
    %19 = sbr.rel (0) target = $region21
  $region20: #{decoder_forward.13} parent=0 // pred_region
    _
  $region21: #{decoder_forward.13} parent=0 // pred_fallthru
    _
  %p21 = scmp.eq.s32.totalorder 0, 0
  // Predicated region
  $region22: #{decoder_forward.13} parent=0 // pred_check
    %p22 = pneg %p21
  $region23: #{decoder_forward.13} parent=0 // pred_check_branch
    %24 = sbr.rel (%p22) target = $region25
  $region24: #{decoder_forward.13} parent=0 // pred_region
    %25 = vst [vmem:[#allocation2] sm:$0xff] 0.0
  $region25: #{decoder_forward.13} parent=0 // pred_fallthru
    _
  %v26 = vld [vmem:[#allocation2] sm:$0xff]
  %v27 = vld [vmem:[%s0] sm:$0xff]
  %v28 = vpack.c.bf16 %v27, %v27
  %v29 = vld [vmem:[%s2] sm:$0xf]
  %v30 = vld [vmem:[%s2 + $0x4] sm:$0xf]
  %v31 = vld [vmem:[%s2 + $0x8] sm:$0xf]
  %v32 = vld [vmem:[%s2 + $0xc] sm:$0xf]
  %v37 = vunpack.c.l.b16 %v29
  %v38 = vunpack.c.l.b16 %v30
  %v39 = vunpack.c.l.b16 %v31
  %v40 = vunpack.c.l.b16 %v32
  %v41 = vpack.c.b16 %v38, %v37
  %v42 = vpack.c.b16 %v40, %v39
  %vm45 = vcmask 261120
  %v47 = vsel %vm45, %v28, 0
  %49 = vmatpush.bf16.msra.mxu0 0
  %50 = vmatpush.bf16.msra.mxu0 0
  %51 = vmatpush.bf16.msra.mxu0 0
  %52 = vmatpush.bf16.msra.mxu0 0
  %53 = vmatpush.bf16.msra.mxu0 0
  %54 = vmatpush.bf16.msra.mxu0 0
  %55 = vmatpush.bf16.msra.mxu0 %v42
  %56 = vmatpush.bf16.msra.mxu0 %v41
  %57 = vmatmul.bf16.gmra.mxu0 %v47
  %v58 = vpop.f32.mrf.mxu0
  %v59 = vadd.f32 0.0, %v58
  %v60 = vpop.f32.mrf.mxu0
  %61 = vdwg.mxu0
  %v62 = vadd.f32 %v26, %v59
  %v63 = vld [vmem:[%s1] sm:$0xff]
  %v64 = vpack.c.bf16 %v63, %v63
  %v65 = vld [vmem:[%s3] sm:$0xf]
  %v66 = vld [vmem:[%s3 + $0x4] sm:$0xf]
  %v67 = vld [vmem:[%s3 + $0x8] sm:$0xf]
  %v68 = vld [vmem:[%s3 + $0xc] sm:$0xf]
  %v73 = vunpack.c.l.b16 %v65
  %v74 = vunpack.c.l.b16 %v66
  %v75 = vunpack.c.l.b16 %v67
  %v76 = vunpack.c.l.b16 %v68
  %v77 = vpack.c.b16 %v74, %v73
  %v78 = vpack.c.b16 %v76, %v75
  %v82 = vsel %vm45, %v64, 0
  %84 = vmatpush.bf16.msra.mxu0 0
  %85 = vmatpush.bf16.msra.mxu0 0
  %86 = vmatpush.bf16.msra.mxu0 0
  %87 = vmatpush.bf16.msra.mxu0 0
  %88 = vmatpush.bf16.msra.mxu0 0
  %89 = vmatpush.bf16.msra.mxu0 0
  %90 = vmatpush.bf16.msra.mxu0 %v78
  %91 = vmatpush.bf16.msra.mxu0 %v77
  %92 = vmatmul.bf16.gmra.mxu0 %v82
  %v93 = vpop.f32.mrf.mxu0
  %v94 = vadd.f32 0.0, %v93
  %v95 = vpop.f32.mrf.mxu0
  %96 = vdwg.mxu0
  %v97 = vadd.f32 %v62, %v94
  %98 = vst [vmem:[#allocation2] sm:$0xff] %v97
  // Predicated region
  $region26: #{decoder_forward.13} parent=0 // pred_check
    %p99 = pneg %p21
  $region27: #{decoder_forward.13} parent=0 // pred_check_branch
    %101 = sbr.rel (%p99) target = $region29
  $region28: #{decoder_forward.13} parent=0 // pred_region
    %v102 = vld [vmem:[#allocation2] sm:$0xff]
    %v103 = vld [vmem:[%s4] sm:$0x1]
    %v105 = vperm.slane %v103, 0
    %v107 = vadd.f32 %v102, %v105
    %108 = vst [vmem:[%s5] sm:$0xff] %v107
  $region29: #{decoder_forward.13} parent=0 // pred_fallthru
    _
  // Predicated region
  $region30: #{decoder_forward.13} parent=0 // pred_check
    _
  $region31: #{decoder_forward.13} parent=0 // pred_check_branch
    %110 = sbr.rel (0) target = $region33
  $region32: #{decoder_forward.13} parent=0 // pred_region
    _
  $region33: #{decoder_forward.13} parent=0 // pred_fallthru
    _
  // Predicated region
  $region34: #{decoder_forward.13} parent=0 // pred_check
    _
  $region35: #{decoder_forward.13} parent=0 // pred_check_branch
    %112 = sbr.rel (0) target = $region37
  $region36: #{decoder_forward.13} parent=0 // pred_region
    _
  $region37: #{decoder_forward.13} parent=0 // pred_fallthru
    _

// kernel: decoder_forward.12
$region0: #{decoder_forward.12}
  #allocation0 [shape = 'u32[]', space=smem, size = 0x4, offset = 0x4, fixed_abs, tag = 'smem constant byte address 0x4 - core index']
  #allocation1 [shape = 'u32[72,128]{1,0:T(1,128)}', space=vmem, size = 0x9000, scoped, tag = 'internal scratch']
  #allocation2 [shape = 's32[1]{0}', space=sflag, size = 0x4, scoped, tag = 'scoped memory for decoder_forward.12']
  #allocation3 [shape = 'u8[512]{0}', space=smem, size = 0x200, scoped, tag = 'prefetched SMEM operand 0']
  %s0 = inlined_call_operand.vmem [shape: s32[2], index: 0, kind: input, shape index: {}]
  %s1 = inlined_call_operand.vmem [shape: f32[2,4,32], index: 1, kind: input, shape index: {}]
  %s2 = inlined_call_operand.vmem [shape: f32[2,6,32], index: 2, kind: input, shape index: {}]
  %s3 = inlined_call_operand.vmem [shape: bf16[32,32], index: 3, kind: input, shape index: {}]
  %s4 = inlined_call_operand.vmem [shape: bf16[32,32], index: 4, kind: input, shape index: {}]
  %s5 = inlined_call_operand.vmem [shape: f32[1,32], index: 5, kind: input, shape index: {}]
  %s6 = inlined_call_operand.vmem [shape: f32[1,32], index: 6, kind: input, shape index: {}]
  %s7 = inlined_call_operand.vmem [shape: f32[2,4,32], index: 7, kind: output, shape index: {0}]
  %s8 = inlined_call_operand.vmem [shape: f32[2,4,6], index: 8, kind: output, shape index: {1}]
  %9 = xla_tuple %s7, %s8
  %s10 = sld [smem:[#allocation0]]
  $region65: #{decoder_forward.12} parent=0
    _
  %s12 = ssub.s32 1, %s10
  %s13 = scalar_select 0, %s12, %s10
  %s15 = sshll.u32 %s0, 4
  %s16 = int_to_ptr.vmem [resolvable:$true] %s15
  %18 = dma.vmem_to_smem %s16, 16, [#allocation3], [#allocation2]
  %20 = dma.done [#allocation2], 16
  %21 = sfence
  loop: start=0, step=1, limit=4
  $region2: #{decoder_forward.12} parent=0 // loop_pre_header
    _
  $region3: #{decoder_forward.12} parent=0 // loop_header
    %s23 = sphi 0, %s27
    %p24 = scmp.ge.s32.totalorder %s23, 4
    %s33 = sphi 0, %s35
    %s36 = sphi 0, %s33
    %s37 = sphi 0, %s36
    %s53 = sphi 0, %s37
    %s59 = sphi 0, %s61
    %s62 = sphi 0, %s59
    %s63 = sphi 0, %s62
    %s79 = sphi 0, %s63
    %s83 = sphi 0, %s83
    %s85 = sphi 0, %s83
    %s86 = sphi 0, %s85
    %s100 = sphi 0, %s86
    %s104 = sphi 0, %s104
    %s106 = sphi 0, %s104
    %s107 = sphi 0, %s106
    %s121 = sphi 0, %s107
    %s125 = sphi 0, %s125
    %s127 = sphi 0, %s125
    %s128 = sphi 0, %s127
    %s142 = sphi 0, %s128
    %s146 = sphi 0, %s146
    %s148 = sphi 0, %s146
    %s149 = sphi 0, %s148
    %s163 = sphi 0, %s149
    %s169 = sphi 0, %s171
    %s172 = sphi 0, %s169
    %s173 = sphi 0, %s172
    %s189 = sphi 0, %s173
    %s195 = sphi 0, %s197
    %s198 = sphi 0, %s195
    %s199 = sphi 0, %s198
    %s215 = sphi 0, %s199
  $region4: #{decoder_forward.12} parent=0 // loop_header_branch
    %26 = sbr.rel (%p24) target = $region8
  $region5: #{decoder_forward.12} parent=0 // loop_body
    %s28 = ssub.s32 %s23, 1
    %s29 = ssub.s32 %s23, 2
    %s30 = sadd.s32 %s23, 1
    %s31 = ssub.s32 %s23, %s30
    %p32 = scmp.eq.s32.totalorder %s31, 0
    %s34 = sadd.s32 %s33, 1
    %s35 = scalar_select %p32, %s33, %s34
    %p38 = pneg %p32
    %p39 = scmp.eq.s32.totalorder %s23, 1
    %p40 = por %p38, %p39
    %p41 = scmp.ne.s32.totalorder %s33, %s36
    %p42 = scmp.eq.s32.totalorder %s23, 0
    %p43 = por %p41, %p42
    %p44 = scmp.ne.s32.totalorder %s33, %s36
    %p45 = scmp.eq.s32.totalorder %s28, 1
    %p46 = por %p44, %p45
    %p47 = scmp.ne.s32.totalorder %s36, %s37
    %p48 = scmp.eq.s32.totalorder %s28, 0
    %p49 = por %p47, %p48
    %p50 = scmp.ne.s32.totalorder %s36, %s37
    %p51 = scmp.eq.s32.totalorder %s29, 1
    %p52 = por %p50, %p51
    %p54 = scmp.ne.s32.totalorder %s37, %s53
    %p55 = scmp.eq.s32.totalorder %s29, 0
    %p56 = por %p54, %p55
    %s57 = ssub.s32 %s23, %s30
    %p58 = scmp.eq.s32.totalorder %s57, 0
    %s60 = sadd.s32 %s59, 1
    %s61 = scalar_select %p58, %s59, %s60
    %p64 = pneg %p58
    %p65 = scmp.eq.s32.totalorder %s23, 1
    %p66 = por %p64, %p65
    %p67 = scmp.ne.s32.totalorder %s59, %s62
    %p68 = scmp.eq.s32.totalorder %s23, 0
    %p69 = por %p67, %p68
    %p70 = scmp.ne.s32.totalorder %s59, %s62
    %p71 = scmp.eq.s32.totalorder %s28, 1
    %p72 = por %p70, %p71
    %p73 = scmp.ne.s32.totalorder %s62, %s63
    %p74 = scmp.eq.s32.totalorder %s28, 0
    %p75 = por %p73, %p74
    %p76 = scmp.ne.s32.totalorder %s62, %s63
    %p77 = scmp.eq.s32.totalorder %s29, 1
    %p78 = por %p76, %p77
    %p80 = scmp.ne.s32.totalorder %s63, %s79
    %p81 = scmp.eq.s32.totalorder %s29, 0
    %p82 = por %p80, %p81
    %s84 = sadd.s32 %s83, 1
    %p87 = scmp.eq.s32.totalorder %s23, 1
    %p88 = scmp.ne.s32.totalorder %s83, %s85
    %p89 = scmp.eq.s32.totalorder %s23, 0
    %p90 = por %p88, %p89
    %p91 = scmp.ne.s32.totalorder %s83, %s85
    %p92 = scmp.eq.s32.totalorder %s28, 1
    %p93 = por %p91, %p92
    %p94 = scmp.ne.s32.totalorder %s85, %s86
    %p95 = scmp.eq.s32.totalorder %s28, 0
    %p96 = por %p94, %p95
    %p97 = scmp.ne.s32.totalorder %s85, %s86
    %p98 = scmp.eq.s32.totalorder %s29, 1
    %p99 = por %p97, %p98
    %p101 = scmp.ne.s32.totalorder %s86, %s100
    %p102 = scmp.eq.s32.totalorder %s29, 0
    %p103 = por %p101, %p102
    %s105 = sadd.s32 %s104, 1
    %p108 = scmp.eq.s32.totalorder %s23, 1
    %p109 = scmp.ne.s32.totalorder %s104, %s106
    %p110 = scmp.eq.s32.totalorder %s23, 0
    %p111 = por %p109, %p110
    %p112 = scmp.ne.s32.totalorder %s104, %s106
    %p113 = scmp.eq.s32.totalorder %s28, 1
    %p114 = por %p112, %p113
    %p115 = scmp.ne.s32.totalorder %s106, %s107
    %p116 = scmp.eq.s32.totalorder %s28, 0
    %p117 = por %p115, %p116
    %p118 = scmp.ne.s32.totalorder %s106, %s107
    %p119 = scmp.eq.s32.totalorder %s29, 1
    %p120 = por %p118, %p119
    %p122 = scmp.ne.s32.totalorder %s107, %s121
    %p123 = scmp.eq.s32.totalorder %s29, 0
    %p124 = por %p122, %p123
    %s126 = sadd.s32 %s125, 1
    %p129 = scmp.eq.s32.totalorder %s23, 1
    %p130 = scmp.ne.s32.totalorder %s125, %s127
    %p131 = scmp.eq.s32.totalorder %s23, 0
    %p132 = por %p130, %p131
    %p133 = scmp.ne.s32.totalorder %s125, %s127
    %p134 = scmp.eq.s32.totalorder %s28, 1
    %p135 = por %p133, %p134
    %p136 = scmp.ne.s32.totalorder %s127, %s128
    %p137 = scmp.eq.s32.totalorder %s28, 0
    %p138 = por %p136, %p137
    %p139 = scmp.ne.s32.totalorder %s127, %s128
    %p140 = scmp.eq.s32.totalorder %s29, 1
    %p141 = por %p139, %p140
    %p143 = scmp.ne.s32.totalorder %s128, %s142
    %p144 = scmp.eq.s32.totalorder %s29, 0
    %p145 = por %p143, %p144
    %s147 = sadd.s32 %s146, 1
    %p150 = scmp.eq.s32.totalorder %s23, 1
    %p151 = scmp.ne.s32.totalorder %s146, %s148
    %p152 = scmp.eq.s32.totalorder %s23, 0
    %p153 = por %p151, %p152
    %p154 = scmp.ne.s32.totalorder %s146, %s148
    %p155 = scmp.eq.s32.totalorder %s28, 1
    %p156 = por %p154, %p155
    %p157 = scmp.ne.s32.totalorder %s148, %s149
    %p158 = scmp.eq.s32.totalorder %s28, 0
    %p159 = por %p157, %p158
    %p160 = scmp.ne.s32.totalorder %s148, %s149
    %p161 = scmp.eq.s32.totalorder %s29, 1
    %p162 = por %p160, %p161
    %p164 = scmp.ne.s32.totalorder %s149, %s163
    %p165 = scmp.eq.s32.totalorder %s29, 0
    %p166 = por %p164, %p165
    %s167 = ssub.s32 %s23, %s30
    %p168 = scmp.eq.s32.totalorder %s167, 0
    %s170 = sadd.s32 %s169, 1
    %s171 = scalar_select %p168, %s169, %s170
    %p174 = pneg %p168
    %p175 = scmp.eq.s32.totalorder %s23, 1
    %p176 = por %p174, %p175
    %p177 = scmp.ne.s32.totalorder %s169, %s172
    %p178 = scmp.eq.s32.totalorder %s23, 0
    %p179 = por %p177, %p178
    %p180 = scmp.ne.s32.totalorder %s169, %s172
    %p181 = scmp.eq.s32.totalorder %s28, 1
    %p182 = por %p180, %p181
    %p183 = scmp.ne.s32.totalorder %s172, %s173
    %p184 = scmp.eq.s32.totalorder %s28, 0
    %p185 = por %p183, %p184
    %p186 = scmp.ne.s32.totalorder %s172, %s173
    %p187 = scmp.eq.s32.totalorder %s29, 1
    %p188 = por %p186, %p187
    %p190 = scmp.ne.s32.totalorder %s173, %s189
    %p191 = scmp.eq.s32.totalorder %s29, 0
    %p192 = por %p190, %p191
    %s193 = ssub.s32 %s23, %s30
    %p194 = scmp.eq.s32.totalorder %s193, 0
    %s196 = sadd.s32 %s195, 1
    %s197 = scalar_select %p194, %s195, %s196
    %p200 = pneg %p194
    %p201 = scmp.eq.s32.totalorder %s23, 1
    %p202 = por %p200, %p201
    %p203 = scmp.ne.s32.totalorder %s195, %s198
    %p204 = scmp.eq.s32.totalorder %s23, 0
    %p205 = por %p203, %p204
    %p206 = scmp.ne.s32.totalorder %s195, %s198
    %p207 = scmp.eq.s32.totalorder %s28, 1
    %p208 = por %p206, %p207
    %p209 = scmp.ne.s32.totalorder %s198, %s199
    %p210 = scmp.eq.s32.totalorder %s28, 0
    %p211 = por %p209, %p210
    %p212 = scmp.ne.s32.totalorder %s198, %s199
    %p213 = scmp.eq.s32.totalorder %s29, 1
    %p214 = por %p212, %p213
    %p216 = scmp.ne.s32.totalorder %s199, %s215
    %p217 = scmp.eq.s32.totalorder %s29, 0
    %p218 = por %p216, %p217
    %p219 = scmp.le.s32.totalorder 1, %s23
    %p220 = scmp.lt.s32.totalorder %s23, 3
    %p221 = pnand %p219, %p220
    %p222 = pneg %p221
    // Predicated region
    $region9: #{decoder_forward.12} parent=5 // pred_check
      _
    $region10: #{decoder_forward.12} parent=5 // pred_check_branch
      %224 = sbr.rel (%p221) target = $region12
    $region11: #{decoder_forward.12} parent=5 // pred_region
      %s225 = ssub.s32 %s23, 1
      // Predicated region
      $region13: #{decoder_forward.12} parent=11 // pred_check
        %p226 = pneg %p96
      $region14: #{decoder_forward.12} parent=11 // pred_check_branch
        %228 = sbr.rel (%p226) target = $region16
      $region15: #{decoder_forward.12} parent=11 // pred_region
        _
      $region16: #{decoder_forward.12} parent=11 // pred_fallthru
        _
      // Predicated region
      $region17: #{decoder_forward.12} parent=11 // pred_check
        %p229 = pneg %p117
      $region18: #{decoder_forward.12} parent=11 // pred_check_branch
        %231 = sbr.rel (%p229) target = $region20
      $region19: #{decoder_forward.12} parent=11 // pred_region
        _
      $region20: #{decoder_forward.12} parent=11 // pred_fallthru
        _
      // Predicated region
      $region21: #{decoder_forward.12} parent=11 // pred_check
        %p232 = pneg %p138
      $region22: #{decoder_forward.12} parent=11 // pred_check_branch
        %234 = sbr.rel (%p232) target = $region24
      $region23: #{decoder_forward.12} parent=11 // pred_region
        _
      $region24: #{decoder_forward.12} parent=11 // pred_fallthru
        _
      // Predicated region
      $region25: #{decoder_forward.12} parent=11 // pred_check
        %p235 = pneg %p159
      $region26: #{decoder_forward.12} parent=11 // pred_check_branch
        %237 = sbr.rel (%p235) target = $region28
      $region27: #{decoder_forward.12} parent=11 // pred_region
        _
      $region28: #{decoder_forward.12} parent=11 // pred_fallthru
        _
    $region12: #{decoder_forward.12} parent=5 // pred_fallthru
      _
    %p238 = scmp.lt.s32.totalorder %s23, 2
    // Predicated region
    $region29: #{decoder_forward.12} parent=5 // pred_check
      %p239 = pneg %p238
    $region30: #{decoder_forward.12} parent=5 // pred_check_branch
      %241 = sbr.rel (%p239) target = $region32
    $region31: #{decoder_forward.12} parent=5 // pred_region
      // Predicated region
      $region33: #{decoder_forward.12} parent=31 // pred_check
        %p242 = pneg %p43
      $region34: #{decoder_forward.12} parent=31 // pred_check_branch
        %244 = sbr.rel (%p242) target = $region36
      $region35: #{decoder_forward.12} parent=31 // pred_region
        %p245 = scmp.lt.s32.totalorder %s23, 1
        %s246 = scalar_select %p245, %s23, 1
        %s247 = smul.addr %s246, 4
        %s248 = scalar_lea.vmem %s1, %s247
      $region36: #{decoder_forward.12} parent=31 // pred_fallthru
        _
      // Predicated region
      $region37: #{decoder_forward.12} parent=31 // pred_check
        %p249 = pneg %p69
      $region38: #{decoder_forward.12} parent=31 // pred_check_branch
        %251 = sbr.rel (%p249) target = $region40
      $region39: #{decoder_forward.12} parent=31 // pred_region
        %p252 = scmp.lt.s32.totalorder %s23, 1
        %s253 = scalar_select %p252, %s23, 1
        %s254 = smul.addr %s253, 8
        %s255 = scalar_lea.vmem %s2, %s254
      $region40: #{decoder_forward.12} parent=31 // pred_fallthru
        _
    $region32: #{decoder_forward.12} parent=5 // pred_fallthru
      _
    %p256 = scmp.le.s32.totalorder 1, %s23
    %p257 = scmp.lt.s32.totalorder %s23, 3
    %p258 = pnand %p256, %p257
    %p259 = pneg %p258
    // Predicated region
    $region41: #{decoder_forward.12} parent=5 // pred_check
      _
    $region42: #{decoder_forward.12} parent=5 // pred_check_branch
      %261 = sbr.rel (%p258) target = $region44
    $region43: #{decoder_forward.12} parent=5 // pred_region
      %s262 = ssub.s32 %s23, 1
      %p263 = scmp.lt.s32.totalorder %s28, 1
      %s264 = scalar_select %p263, %s28, 1
      %s265 = smul.addr %s264, 4
      %s266 = scalar_lea.vmem %s1, %s265
      %p267 = pneg %p49
      %p268 = pneg %p46
      %p269 = scmp.lt.s32.totalorder %s28, 1
      %s270 = scalar_select %p269, %s28, 1
      %s271 = smul.addr %s270, 8
      %s272 = scalar_lea.vmem %s2, %s271
      %p273 = pneg %p75
      %p274 = pneg %p72
      %p275 = pneg %p96
      %p276 = pneg %p93
      %p277 = pneg %p117
      %p278 = pneg %p114
      %p279 = pneg %p138
      %p280 = pneg %p135
      %p281 = pneg %p159
      %p282 = pneg %p156
      %p283 = pneg %p185
      %p284 = pneg %p182
      %p285 = scmp.lt.s32.totalorder %s28, 1
      %s286 = scalar_select %p285, %s28, 1
      %s287 = smul.addr %s286, 4
      %s288 = scalar_lea.vmem %s7, %s287
      %p289 = pneg %p211
      %p290 = pneg %p208
      %p291 = scmp.lt.s32.totalorder %s28, 1
      %s292 = scalar_select %p291, %s28, 1
      %s293 = smul.addr %s292, 4
      %s294 = scalar_lea.vmem %s8, %s293
      %p295 = scmp.lt.s32.totalorder %s28, 1
      %s296 = scalar_select %p295, %s28, 1
      %s297 = smul.addr %s296, 4
      %s298 = scalar_lea.vmem %s1, %s297
      %p299 = scmp.lt.s32.totalorder %s28, 1
      %s300 = scalar_select %p299, %s28, 1
      %s301 = smul.addr %s300, 8
      %s302 = scalar_lea.vmem %s2, %s301
      %p303 = scmp.lt.s32.totalorder %s28, 1
      %s304 = scalar_select %p303, %s28, 1
      %s305 = smul.addr %s304, 4
      %s306 = scalar_lea.vmem %s7, %s305
      %p307 = scmp.lt.s32.totalorder %s28, 1
      %s308 = scalar_select %p307, %s28, 1
      %s309 = smul.addr %s308, 4
      %s310 = scalar_lea.vmem %s8, %s309
      %v312 = vld [vmem:[%s298] sm:$0xf]
      %v313 = vpack.c.bf16 %v312, %v312
      %v314 = vld [vmem:[%s302] sm:$0x3f]
      %v315 = vpack.c.bf16 %v314, %v314
      %v316 = vld [vmem:[%s3] sm:$0xf]
      %v317 = vld [vmem:[%s3 + $0x4] sm:$0xf]
      %v318 = vld [vmem:[%s3 + $0x8] sm:$0xf]
      %v319 = vld [vmem:[%s3 + $0xc] sm:$0xf]
      %v324 = vunpack.c.l.b16 %v316
      %v325 = vunpack.c.l.b16 %v317
      %v326 = vunpack.c.l.b16 %v318
      %v327 = vunpack.c.l.b16 %v319
      %v328 = vpack.c.b16 %v325, %v324
      %v329 = vpack.c.b16 %v327, %v326
      %vm332 = vcmask 261120
      %v334 = vsel %vm332, %v313, 0
      %336 = vmatpush.bf16.msra.mxu0 0
      %337 = vmatpush.bf16.msra.mxu0 0
      %338 = vmatpush.bf16.msra.mxu0 0
      %339 = vmatpush.bf16.msra.mxu0 0
      %340 = vmatpush.bf16.msra.mxu0 0
      %341 = vmatpush.bf16.msra.mxu0 0
      %342 = vmatpush.bf16.msra.mxu0 %v329
      %343 = vmatpush.bf16.msra.mxu0 %v328
      %344 = vmatmul.bf16.gmra.mxu0 %v334
      %v345 = vpop.f32.mrf.mxu0
      %v346 = vadd.f32 0.0, %v345
      %v347 = vpop.f32.mrf.mxu0
      %348 = vdwg.mxu0
      %v349 = vld [vmem:[%s4] sm:$0xf]
      %v350 = vld [vmem:[%s4 + $0x4] sm:$0xf]
      %v351 = vld [vmem:[%s4 + $0x8] sm:$0xf]
      %v352 = vld [vmem:[%s4 + $0xc] sm:$0xf]
      %v357 = vunpack.c.l.b16 %v349
      %v358 = vunpack.c.l.b16 %v350
      %v359 = vunpack.c.l.b16 %v351
      %v360 = vunpack.c.l.b16 %v352
      %v361 = vpack.c.b16 %v358, %v357
      %v362 = vpack.c.b16 %v360, %v359
      %v366 = vsel %vm332, %v315, 0
      %368 = vmatpush.bf16.msra.mxu0 0
      %369 = vmatpush.bf16.msra.mxu0 0
      %370 = vmatpush.bf16.msra.mxu0 0
      %371 = vmatpush.bf16.msra.mxu0 0
      %372 = vmatpush.bf16.msra.mxu0 0
      %373 = vmatpush.bf16.msra.mxu0 0
      %374 = vmatpush.bf16.msra.mxu0 %v362
      %375 = vmatpush.bf16.msra.mxu0 %v361
      %376 = vmatmul.bf16.gmra.mxu0 %v366
      %v377 = vpop.f32.mrf.mxu0
      %v378 = vadd.f32 0.0, %v377
      %v379 = vpop.f32.mrf.mxu0
      %380 = vdwg.mxu0
      %v382 = vrot.slane %v346, 1
      %v383 = vrot.slane %v346, 2
      %v384 = vrot.slane %v346, 3
      %v385 = vperm.slane %v346, 0
      %v386 = vperm.slane %v382, 0
      %v387 = vperm.slane %v383, 0
      %v388 = vperm.slane %v384, 0
      %v393 = vadd.f32 %v385, %v378
      %v394 = vadd.f32 %v386, %v378
      %v395 = vadd.f32 %v387, %v378
      %v396 = vadd.f32 %v388, %v378
      %v397 = vld [vmem:[%s5] sm:$0x1]
      %v399 = vperm.slane %v397, 0
      %v401 = vadd.f32 %v393, %v399
      %v402 = vadd.f32 %v394, %v399
      %v403 = vadd.f32 %v395, %v399
      %v404 = vadd.f32 %v396, %v399
      %v405 = vtanh.pop %v401
      %v406 = vtanh.pop %v402
      %v407 = vtanh.pop %v403
      %v408 = vtanh.pop %v404
      %v409 = vld [vmem:[%s6] sm:$0x1]
      %v411 = vperm.slane %v409, 0
      %v413 = vmul.f32 %v405, %v411
      %v414 = vmul.f32 %v406, %v411
      %v415 = vmul.f32 %v407, %v411
      %v416 = vmul.f32 %v408, %v411
      %vm417 = vcmask 259072
      %v418 = vsel %vm417, %v413, 0.0
      %419 = vadd.xlane.f32.xlu0 %v418
      %v420 = vpop.xlane.xlu0 %419
      %v421 = vsel %vm417, %v414, 0.0
      %422 = vadd.xlane.f32.xlu0 %v421
      %v423 = vpop.xlane.xlu0 %422
      %v424 = vsel %vm417, %v415, 0.0
      %425 = vadd.xlane.f32.xlu0 %v424
      %v426 = vpop.xlane.xlu0 %425
      %v427 = vsel %vm417, %v416, 0.0
      %428 = vadd.xlane.f32.xlu0 %v427
      %v429 = vpop.xlane.xlu0 %428
      %s430 = sld [smem:[#allocation3 + %s28]]
      %v431 = vlaneseq
      %v432 = vand.u32 %v431, 127
      %v433 = vstv %s430
      %vm434 = vcmp.ge.s32.totalorder %v432, %v433
      %v439 = vperm.slane %v420, %v432
      %v440 = vperm.slane %v423, %v432
      %v441 = vperm.slane %v426, %v432
      %v442 = vperm.slane %v429, %v432
      %vm443 = vcmask 1041409
      %v444 = vsel %vm443, %v440, %v439
      %vm445 = vcmask 1042434
      %v446 = vsel %vm445, %v441, %v444
      %vm447 = vcmask 1043459
      %v448 = vsel %vm447, %v442, %v446
      %v450 = vsel %vm434, -65504.0, %v448
      %vm451 = vcmask 44032
      %v452 = vsel %vm451, %v450, -inf
      %453 = vmax.xlane.f32.xlu0 %v452
      %v454 = vpop.xlane.xlu0 %453
      %v455 = vsub.f32 %v450, %v454
      %v456 = vmul.f32 %v455, 1.442695
      %v457 = vpow.pop %v456
      %v458 = vsel %vm451, %v457, 0.0
      %459 = vadd.xlane.f32.xlu0 %v458
      %v460 = vpop.xlane.xlu0 %459
      %v461 = vrcp.pop %v460
      %v462 = vmul.f32 %v460, %v461
      %v463 = vsub.f32 1.0, %v462
      %v464 = vmul.f32 %v461, %v463
      %v465 = vadd.f32 %v461, %v464
      %vm466 = vweird.f32 %v460
      %vm467 = vweird.f32 %v461
      %vm468 = vmor %vm466, %vm467
      %v469 = vsel %vm468, %v461, %v465
      %v470 = vand.u32 2147483647, %v460
      %vm471 = vcmp.eq.f32.partialorder %v470, 8.507059e+37
      %v472 = vand.u32 %v460, 2147483648
      %v473 = vor.u32 1.1754944e-38, %v472
      %v474 = vsel %vm471, %v473, %v469
      %v475 = vmul.f32 %v457, %v474
      %v476 = vpack.c.bf16 %v475, %v475
      %vm477 = vcmask 48128
      %v479 = vsel %vm477, %v476, 0
      %vm481 = vcmask 1042432
      %v482 = vsel %vm481, %v315, 0
      %484 = vmatpush.bf16.msra.mxu0 0
      %485 = vmatpush.bf16.msra.mxu0 0
      %486 = vmatpush.bf16.msra.mxu0 0
      %487 = vmatpush.bf16.msra.mxu0 0
      %488 = vmatpush.bf16.msra.mxu0 0
      %489 = vmatpush.bf16.msra.mxu0 0
      %490 = vmatpush.bf16.msra.mxu0 0
      %491 = vmatpush.bf16.msra.mxu0 %v482
      %492 = vmatmul.bf16.gmra.mxu0 %v479
      %v493 = vpop.f32.mrf.mxu0
      %v494 = vadd.f32 0.0, %v493
      %v495 = vpop.f32.mrf.mxu0
      %496 = vdwg.mxu0
      %vm497 = vcmask 257024
      %498 = vst.msk [vmem:[%s306] sm:$0xf] %vm497, %v494
      %499 = vst.msk [vmem:[%s310] sm:$0xf] %vm451, %v475
      %p500 = scmp.lt.s32.totalorder %s28, 1
      %s501 = scalar_select %p500, %s28, 1
      %s502 = smul.addr %s501, 4
      %s503 = scalar_lea.vmem %s7, %s502
      %p504 = scmp.lt.s32.totalorder %s28, 1
      %s505 = scalar_select %p504, %s28, 1
      %s506 = smul.addr %s505, 4
      %s507 = scalar_lea.vmem %s8, %s506
      // Predicated region
      $region45: #{decoder_forward.12} parent=43 // pred_check
        %p508 = pneg %p182
      $region46: #{decoder_forward.12} parent=43 // pred_check_branch
        %510 = sbr.rel (%p508) target = $region48
      $region47: #{decoder_forward.12} parent=43 // pred_region
        _
      $region48: #{decoder_forward.12} parent=43 // pred_fallthru
        _
      // Predicated region
      $region49: #{decoder_forward.12} parent=43 // pred_check
        %p511 = pneg %p208
      $region50: #{decoder_forward.12} parent=43 // pred_check_branch
        %513 = sbr.rel (%p511) target = $region52
      $region51: #{decoder_forward.12} parent=43 // pred_region
        _
      $region52: #{decoder_forward.12} parent=43 // pred_fallthru
        _
    $region44: #{decoder_forward.12} parent=5 // pred_fallthru
      _
    %p514 = scmp.le.s32.totalorder 2, %s23
    // Predicated region
    $region53: #{decoder_forward.12} parent=5 // pred_check
      %p515 = pneg %p514
    $region54: #{decoder_forward.12} parent=5 // pred_check_branch
      %517 = sbr.rel (%p515) target = $region56
    $region55: #{decoder_forward.12} parent=5 // pred_region
      %s518 = ssub.s32 %s23, 2
      // Predicated region
      $region57: #{decoder_forward.12} parent=55 // pred_check
        %p519 = pneg %p188
      $region58: #{decoder_forward.12} parent=55 // pred_check_branch
        %521 = sbr.rel (%p519) target = $region60
      $region59: #{decoder_forward.12} parent=55 // pred_region
        %p522 = scmp.lt.s32.totalorder %s29, 1
        %s523 = scalar_select %p522, %s29, 1
        %s524 = smul.addr %s523, 4
        %s525 = scalar_lea.vmem %s7, %s524
      $region60: #{decoder_forward.12} parent=55 // pred_fallthru
        _
      // Predicated region
      $region61: #{decoder_forward.12} parent=55 // pred_check
        %p526 = pneg %p214
      $region62: #{decoder_forward.12} parent=55 // pred_check_branch
        %528 = sbr.rel (%p526) target = $region64
      $region63: #{decoder_forward.12} parent=55 // pred_region
        %p529 = scmp.lt.s32.totalorder %s29, 1
        %s530 = scalar_select %p529, %s29, 1
        %s531 = smul.addr %s530, 4
        %s532 = scalar_lea.vmem %s8, %s531
      $region64: #{decoder_forward.12} parent=55 // pred_fallthru
        _
    $region56: #{decoder_forward.12} parent=5 // pred_fallthru
      _
  $region6: #{decoder_forward.12} parent=0 // loop_footer
    %s27 = sadd.s32 1, %s23
  $region7: #{decoder_forward.12} parent=0 // loop_footer_branch
    %22 = sbr.rel target = $region3
  $region8: #{decoder_forward.12} parent=0 // loop_exit
    _

// kernel: decoder_forward.11
$region0: #{decoder_forward.11}
  #allocation0 [shape = 'u32[]', space=smem, size = 0x4, offset = 0x4, fixed_abs, tag = 'smem constant byte address 0x4 - core index']
  #allocation1 [shape = 'u32[72,128]{1,0:T(1,128)}', space=vmem, size = 0x9000, scoped, tag = 'internal scratch']
  #allocation2 [shape = 'f32[2,32]{1,0:T(2,128)}', space=vmem, size = 0x400, scoped, tag = 'scratch operand']
  #allocation3 [shape = 'f32[2,32]{1,0:T(2,128)}', space=vmem, size = 0x400, scoped, tag = 'scratch operand']
  %s0 = inlined_call_operand.vmem [shape: f32[4,2,128], index: 0, kind: input, shape index: {}]
  %s1 = inlined_call_operand.vmem [shape: bf16[32,128], index: 1, kind: input, shape index: {}]
  %s2 = inlined_call_operand.vmem [shape: f32[4,2,32], index: 2, kind: output, shape index: {}]
  %s3 = sld [smem:[#allocation0]]
  $region22: #{decoder_forward.11} parent=0
    _
  %s5 = ssub.s32 1, %s3
  %s6 = scalar_select 0, %s5, %s3
  // Predicated region
  $region2: #{decoder_forward.11} parent=0 // pred_check
    _
  $region3: #{decoder_forward.11} parent=0 // pred_check_branch
    %8 = sbr.rel (0) target = $region5
  $region4: #{decoder_forward.11} parent=0 // pred_region
    _
  $region5: #{decoder_forward.11} parent=0 // pred_fallthru
    _
  // Predicated region
  $region6: #{decoder_forward.11} parent=0 // pred_check
    _
  $region7: #{decoder_forward.11} parent=0 // pred_check_branch
    %10 = sbr.rel (0) target = $region9
  $region8: #{decoder_forward.11} parent=0 // pred_region
    _
  $region9: #{decoder_forward.11} parent=0 // pred_fallthru
    _
  %p12 = scmp.eq.s32.totalorder 0, 0
  // Predicated region
  $region10: #{decoder_forward.11} parent=0 // pred_check
    %p13 = pneg %p12
  $region11: #{decoder_forward.11} parent=0 // pred_check_branch
    %15 = sbr.rel (%p13) target = $region13
  $region12: #{decoder_forward.11} parent=0 // pred_region
    %vm16 = vcmask 254976
    %17 = vst.msk [vmem:[#allocation2] sm:$0x3] %vm16, 0.0
    %18 = vst.msk [vmem:[#allocation3] sm:$0x3] %vm16, 0.0
  $region13: #{decoder_forward.11} parent=0 // pred_fallthru
    _
  %v19 = vld [vmem:[%s0] sm:$0x3]
  %v20 = vld [vmem:[#allocation2] sm:$0x3]
  %v21 = vpack.c.bf16 %v20, %v20
  %v22 = vld [vmem:[%s1] sm:$0xf]
  %v23 = vld [vmem:[%s1 + $0x4] sm:$0xf]
  %v24 = vld [vmem:[%s1 + $0x8] sm:$0xf]
  %v25 = vld [vmem:[%s1 + $0xc] sm:$0xf]
  %v30 = vunpack.c.l.b16 %v22
  %v31 = vunpack.c.l.b16 %v23
  %v32 = vunpack.c.l.b16 %v24
  %v33 = vunpack.c.l.b16 %v25
  %v34 = vpack.c.b16 %v31, %v30
  %v35 = vpack.c.b16 %v33, %v32
  %vm38 = vcmask 261120
  %v40 = vsel %vm38, %v21, 0
  %42 = vmatpush.bf16.msra.mxu0 0
  %43 = vmatpush.bf16.msra.mxu0 0
  %44 = vmatpush.bf16.msra.mxu0 0
  %45 = vmatpush.bf16.msra.mxu0 0
  %46 = vmatpush.bf16.msra.mxu0 0
  %47 = vmatpush.bf16.msra.mxu0 0
  %48 = vmatpush.bf16.msra.mxu0 %v35
  %49 = vmatpush.bf16.msra.mxu0 %v34
  %50 = vmatmul.bf16.gmra.mxu0 %v40
  %v51 = vpop.f32.mrf.mxu0
  %v52 = vadd.f32 0.0, %v51
  %v53 = vpop.f32.mrf.mxu0
  %54 = vdwg.mxu0
  %v55 = vadd.f32 %v19, %v52
  %v56 = vxor.u32 %v55, 2147483648
  %v57 = vmul.f32 %v56, 1.442695
  %v58 = vpow.pop %v57
  %v59 = vadd.f32 %v58, 1.0
  %v60 = vrcp.pop %v59
  %v61 = vmul.f32 %v59, %v60
  %v62 = vsub.f32 1.0, %v61
  %v63 = vmul.f32 %v60, %v62
  %v64 = vadd.f32 %v60, %v63
  %vm65 = vweird.f32 %v59
  %vm66 = vweird.f32 %v60
  %vm67 = vmor %vm65, %vm66
  %v68 = vsel %vm67, %v60, %v64
  %v69 = vand.u32 2147483647, %v59
  %vm70 = vcmp.eq.f32.partialorder %v69, 8.507059e+37
  %v71 = vand.u32 %v59, 2147483648
  %v72 = vor.u32 1.1754944e-38, %v71
  %v73 = vsel %vm70, %v72, %v68
  %v74 = vmul.f32 1.0, %v73
  %v75 = vtanh.pop %v55
  %v76 = vld [vmem:[#allocation3] sm:$0x3]
  %78 = vrot.lane.b32.xlu0 %v76, 32
  %v79 = vpop.permute.xlu0 %78
  %v81 = vmul.f32 %v74, %v79
  %83 = vrot.lane.b32.xlu0 %v75, 64
  %v84 = vpop.permute.xlu0 %83
  %v86 = vmul.f32 %v74, %v84
  %88 = vrot.lane.b32.xlu0 %v86, 32
  %v89 = vpop.permute.xlu0 %88
  %v91 = vadd.f32 %v81, %v89
  %v92 = vtanh.pop %v91
  %94 = vrot.lane.b32.xlu0 %v92, 64
  %v95 = vpop.permute.xlu0 %94
  %v97 = vmul.f32 %v74, %v95
  %99 = vrot.lane.b32.xlu0 %v91, 96
  %v100 = vpop.permute.xlu0 %99
  %vm102 = vcmask 254976
  %103 = vst.msk [vmem:[#allocation3] sm:$0x3] %vm102, %v100
  %105 = vrot.lane.b32.xlu0 %v97, 32
  %v106 = vpop.permute.xlu0 %105
  %108 = vst.msk [vmem:[#allocation2] sm:$0x3] %vm102, %v106
  %109 = vst.msk [vmem:[%s2] sm:$0x3] %vm102, %v106
  %s110 = scalar_lea.vmem %s0, 2
  %v111 = vld [vmem:[%s110] sm:$0x3]
  %v112 = vld [vmem:[#allocation2] sm:$0x3]
  %v113 = vpack.c.bf16 %v112, %v112
  %v114 = vld [vmem:[%s1] sm:$0xf]
  %v115 = vld [vmem:[%s1 + $0x4] sm:$0xf]
  %v116 = vld [vmem:[%s1 + $0x8] sm:$0xf]
  %v117 = vld [vmem:[%s1 + $0xc] sm:$0xf]
  %v122 = vunpack.c.l.b16 %v114
  %v123 = vunpack.c.l.b16 %v115
  %v124 = vunpack.c.l.b16 %v116
  %v125 = vunpack.c.l.b16 %v117
  %v126 = vpack.c.b16 %v123, %v122
  %v127 = vpack.c.b16 %v125, %v124
  %v131 = vsel %vm38, %v113, 0
  %133 = vmatpush.bf16.msra.mxu0 0
  %134 = vmatpush.bf16.msra.mxu0 0
  %135 = vmatpush.bf16.msra.mxu0 0
  %136 = vmatpush.bf16.msra.mxu0 0
  %137 = vmatpush.bf16.msra.mxu0 0
  %138 = vmatpush.bf16.msra.mxu0 0
  %139 = vmatpush.bf16.msra.mxu0 %v127
  %140 = vmatpush.bf16.msra.mxu0 %v126
  %141 = vmatmul.bf16.gmra.mxu0 %v131
  %v142 = vpop.f32.mrf.mxu0
  %v143 = vadd.f32 0.0, %v142
  %v144 = vpop.f32.mrf.mxu0
  %145 = vdwg.mxu0
  %v146 = vadd.f32 %v111, %v143
  %v147 = vxor.u32 %v146, 2147483648
  %v148 = vmul.f32 %v147, 1.442695
  %v149 = vpow.pop %v148
  %v150 = vadd.f32 %v149, 1.0
  %v151 = vrcp.pop %v150
  %v152 = vmul.f32 %v150, %v151
  %v153 = vsub.f32 1.0, %v152
  %v154 = vmul.f32 %v151, %v153
  %v155 = vadd.f32 %v151, %v154
  %vm156 = vweird.f32 %v150
  %vm157 = vweird.f32 %v151
  %vm158 = vmor %vm156, %vm157
  %v159 = vsel %vm158, %v151, %v155
  %v160 = vand.u32 2147483647, %v150
  %vm161 = vcmp.eq.f32.partialorder %v160, 8.507059e+37
  %v162 = vand.u32 %v150, 2147483648
  %v163 = vor.u32 1.1754944e-38, %v162
  %v164 = vsel %vm161, %v163, %v159
  %v165 = vmul.f32 1.0, %v164
  %v166 = vtanh.pop %v146
  %v167 = vld [vmem:[#allocation3] sm:$0x3]
  %169 = vrot.lane.b32.xlu0 %v167, 32
  %v170 = vpop.permute.xlu0 %169
  %v172 = vmul.f32 %v165, %v170
  %174 = vrot.lane.b32.xlu0 %v166, 64
  %v175 = vpop.permute.xlu0 %174
  %v177 = vmul.f32 %v165, %v175
  %179 = vrot.lane.b32.xlu0 %v177, 32
  %v180 = vpop.permute.xlu0 %179
  %v182 = vadd.f32 %v172, %v180
  %v183 = vtanh.pop %v182
  %185 = vrot.lane.b32.xlu0 %v183, 64
  %v186 = vpop.permute.xlu0 %185
  %v188 = vmul.f32 %v165, %v186
  %190 = vrot.lane.b32.xlu0 %v182, 96
  %v191 = vpop.permute.xlu0 %190
  %193 = vst.msk [vmem:[#allocation3] sm:$0x3] %vm102, %v191
  %195 = vrot.lane.b32.xlu0 %v188, 32
  %v196 = vpop.permute.xlu0 %195
  %198 = vst.msk [vmem:[#allocation2] sm:$0x3] %vm102, %v196
  %s199 = scalar_lea.vmem %s2, 2
  %200 = vst.msk [vmem:[%s199] sm:$0x3] %vm102, %v196
  %s201 = scalar_lea.vmem %s0, 4
  %v202 = vld [vmem:[%s201] sm:$0x3]
  %v203 = vld [vmem:[#allocation2] sm:$0x3]
  %v204 = vpack.c.bf16 %v203, %v203
  %v205 = vld [vmem:[%s1] sm:$0xf]
  %v206 = vld [vmem:[%s1 + $0x4] sm:$0xf]
  %v207 = vld [vmem:[%s1 + $0x8] sm:$0xf]
  %v208 = vld [vmem:[%s1 + $0xc] sm:$0xf]
  %v213 = vunpack.c.l.b16 %v205
  %v214 = vunpack.c.l.b16 %v206
  %v215 = vunpack.c.l.b16 %v207
  %v216 = vunpack.c.l.b16 %v208
  %v217 = vpack.c.b16 %v214, %v213
  %v218 = vpack.c.b16 %v216, %v215
  %v222 = vsel %vm38, %v204, 0
  %224 = vmatpush.bf16.msra.mxu0 0
  %225 = vmatpush.bf16.msra.mxu0 0
  %226 = vmatpush.bf16.msra.mxu0 0
  %227 = vmatpush.bf16.msra.mxu0 0
  %228 = vmatpush.bf16.msra.mxu0 0
  %229 = vmatpush.bf16.msra.mxu0 0
  %230 = vmatpush.bf16.msra.mxu0 %v218
  %231 = vmatpush.bf16.msra.mxu0 %v217
  %232 = vmatmul.bf16.gmra.mxu0 %v222
  %v233 = vpop.f32.mrf.mxu0
  %v234 = vadd.f32 0.0, %v233
  %v235 = vpop.f32.mrf.mxu0
  %236 = vdwg.mxu0
  %v237 = vadd.f32 %v202, %v234
  %v238 = vxor.u32 %v237, 2147483648
  %v239 = vmul.f32 %v238, 1.442695
  %v240 = vpow.pop %v239
  %v241 = vadd.f32 %v240, 1.0
  %v242 = vrcp.pop %v241
  %v243 = vmul.f32 %v241, %v242
  %v244 = vsub.f32 1.0, %v243
  %v245 = vmul.f32 %v242, %v244
  %v246 = vadd.f32 %v242, %v245
  %vm247 = vweird.f32 %v241
  %vm248 = vweird.f32 %v242
  %vm249 = vmor %vm247, %vm248
  %v250 = vsel %vm249, %v242, %v246
  %v251 = vand.u32 2147483647, %v241
  %vm252 = vcmp.eq.f32.partialorder %v251, 8.507059e+37
  %v253 = vand.u32 %v241, 2147483648
  %v254 = vor.u32 1.1754944e-38, %v253
  %v255 = vsel %vm252, %v254, %v250
  %v256 = vmul.f32 1.0, %v255
  %v257 = vtanh.pop %v237
  %v258 = vld [vmem:[#allocation3] sm:$0x3]
  %260 = vrot.lane.b32.xlu0 %v258, 32
  %v261 = vpop.permute.xlu0 %260
  %v263 = vmul.f32 %v256, %v261
  %265 = vrot.lane.b32.xlu0 %v257, 64
  %v266 = vpop.permute.xlu0 %265
  %v268 = vmul.f32 %v256, %v266
  %270 = vrot.lane.b32.xlu0 %v268, 32
  %v271 = vpop.permute.xlu0 %270
  %v273 = vadd.f32 %v263, %v271
  %v274 = vtanh.pop %v273
  %276 = vrot.lane.b32.xlu0 %v274, 64
  %v277 = vpop.permute.xlu0 %276
  %v279 = vmul.f32 %v256, %v277
  %281 = vrot.lane.b32.xlu0 %v273, 96
  %v282 = vpop.permute.xlu0 %281
  %284 = vst.msk [vmem:[#allocation3] sm:$0x3] %vm102, %v282
  %286 = vrot.lane.b32.xlu0 %v279, 32
  %v287 = vpop.permute.xlu0 %286
  %289 = vst.msk [vmem:[#allocation2] sm:$0x3] %vm102, %v287
  %s290 = scalar_lea.vmem %s2, 4
  %291 = vst.msk [vmem:[%s290] sm:$0x3] %vm102, %v287
  %s292 = scalar_lea.vmem %s0, 6
  %v293 = vld [vmem:[%s292] sm:$0x3]
  %v294 = vld [vmem:[#allocation2] sm:$0x3]
  %v295 = vpack.c.bf16 %v294, %v294
  %v296 = vld [vmem:[%s1] sm:$0xf]
  %v297 = vld [vmem:[%s1 + $0x4] sm:$0xf]
  %v298 = vld [vmem:[%s1 + $0x8] sm:$0xf]
  %v299 = vld [vmem:[%s1 + $0xc] sm:$0xf]
  %v304 = vunpack.c.l.b16 %v296
  %v305 = vunpack.c.l.b16 %v297
  %v306 = vunpack.c.l.b16 %v298
  %v307 = vunpack.c.l.b16 %v299
  %v308 = vpack.c.b16 %v305, %v304
  %v309 = vpack.c.b16 %v307, %v306
  %v313 = vsel %vm38, %v295, 0
  %315 = vmatpush.bf16.msra.mxu0 0
  %316 = vmatpush.bf16.msra.mxu0 0
  %317 = vmatpush.bf16.msra.mxu0 0
  %318 = vmatpush.bf16.msra.mxu0 0
  %319 = vmatpush.bf16.msra.mxu0 0
  %320 = vmatpush.bf16.msra.mxu0 0
  %321 = vmatpush.bf16.msra.mxu0 %v309
  %322 = vmatpush.bf16.msra.mxu0 %v308
  %323 = vmatmul.bf16.gmra.mxu0 %v313
  %v324 = vpop.f32.mrf.mxu0
  %v325 = vadd.f32 0.0, %v324
  %v326 = vpop.f32.mrf.mxu0
  %327 = vdwg.mxu0
  %v328 = vadd.f32 %v293, %v325
  %v329 = vxor.u32 %v328, 2147483648
  %v330 = vmul.f32 %v329, 1.442695
  %v331 = vpow.pop %v330
  %v332 = vadd.f32 %v331, 1.0
  %v333 = vrcp.pop %v332
  %v334 = vmul.f32 %v332, %v333
  %v335 = vsub.f32 1.0, %v334
  %v336 = vmul.f32 %v333, %v335
  %v337 = vadd.f32 %v333, %v336
  %vm338 = vweird.f32 %v332
  %vm339 = vweird.f32 %v333
  %vm340 = vmor %vm338, %vm339
  %v341 = vsel %vm340, %v333, %v337
  %v342 = vand.u32 2147483647, %v332
  %vm343 = vcmp.eq.f32.partialorder %v342, 8.507059e+37
  %v344 = vand.u32 %v332, 2147483648
  %v345 = vor.u32 1.1754944e-38, %v344
  %v346 = vsel %vm343, %v345, %v341
  %v347 = vmul.f32 1.0, %v346
  %v348 = vtanh.pop %v328
  %v349 = vld [vmem:[#allocation3] sm:$0x3]
  %351 = vrot.lane.b32.xlu0 %v349, 32
  %v352 = vpop.permute.xlu0 %351
  %v354 = vmul.f32 %v347, %v352
  %356 = vrot.lane.b32.xlu0 %v348, 64
  %v357 = vpop.permute.xlu0 %356
  %v359 = vmul.f32 %v347, %v357
  %361 = vrot.lane.b32.xlu0 %v359, 32
  %v362 = vpop.permute.xlu0 %361
  %v364 = vadd.f32 %v354, %v362
  %v365 = vtanh.pop %v364
  %367 = vrot.lane.b32.xlu0 %v365, 64
  %v368 = vpop.permute.xlu0 %367
  %v370 = vmul.f32 %v347, %v368
  %372 = vrot.lane.b32.xlu0 %v364, 96
  %v373 = vpop.permute.xlu0 %372
  %375 = vst.msk [vmem:[#allocation3] sm:$0x3] %vm102, %v373
  %377 = vrot.lane.b32.xlu0 %v370, 32
  %v378 = vpop.permute.xlu0 %377
  %380 = vst.msk [vmem:[#allocation2] sm:$0x3] %vm102, %v378
  %s381 = scalar_lea.vmem %s2, 6
  %382 = vst.msk [vmem:[%s381] sm:$0x3] %vm102, %v378
  // Predicated region
  $region14: #{decoder_forward.11} parent=0 // pred_check
    _
  $region15: #{decoder_forward.11} parent=0 // pred_check_branch
    %384 = sbr.rel (0) target = $region17
  $region16: #{decoder_forward.11} parent=0 // pred_region
    _
  $region17: #{decoder_forward.11} parent=0 // pred_fallthru
    _
  // Predicated region
  $region18: #{decoder_forward.11} parent=0 // pred_check
    _
  $region19: #{decoder_forward.11} parent=0 // pred_check_branch
    %386 = sbr.rel (0) target = $region21
  $region20: #{decoder_forward.11} parent=0 // pred_region
    _
  $region21: #{decoder_forward.11} parent=0 // pred_fallthru
    _

// kernel: decoder_forward.19
$region0: #{decoder_forward.19}
  #allocation0 [shape = 'u32[]', space=smem, size = 0x4, offset = 0x4, fixed_abs, tag = 'smem constant byte address 0x4 - core index']
  #allocation1 [shape = 'u32[72,128]{1,0:T(1,128)}', space=vmem, size = 0x9000, scoped, tag = 'internal scratch']
  #allocation2 [shape = 'f32[8,64]{1,0:T(8,128)}', space=vmem, size = 0x1000, scoped, tag = 'scratch operand']
  %s0 = inlined_call_operand.vmem [shape: f32[8,32], index: 0, kind: input, shape index: {}]
  %s1 = inlined_call_operand.vmem [shape: bf16[32,64], index: 1, kind: input, shape index: {}]
  %s2 = inlined_call_operand.vmem [shape: f32[1,64], index: 2, kind: input, shape index: {}]
  %s3 = inlined_call_operand.hbm [shape: f32[8,64], index: 3, kind: output, shape index: {}]
  %s4 = sld [smem:[#allocation0]]
  $region30: #{decoder_forward.19} parent=0
    _
  %s6 = ssub.s32 1, %s4
  %s7 = scalar_select 0, %s6, %s4
  $region1: #{decoder_forward.19} parent=0
    #allocation3 [shape = 'u8[4096]{0}', space=vmem, size = 0x1000, scoped, tag = 'output window, operand 0, single buffered']
    #allocation4 [shape = 's32[1]{0}', space=sflag, size = 0x4, scoped, tag = 'scoped memory for decoder_forward.19']
    %8 = vsyncpa [#allocation4], 0
    // Predicated region
    $region2: #{decoder_forward.19} parent=1 // pred_check
      _
    $region3: #{decoder_forward.19} parent=1 // pred_check_branch
      %10 = sbr.rel (0) target = $region5
    $region4: #{decoder_forward.19} parent=1 // pred_region
      _
    $region5: #{decoder_forward.19} parent=1 // pred_fallthru
      _
    // Predicated region
    $region6: #{decoder_forward.19} parent=1 // pred_check
      _
    $region7: #{decoder_forward.19} parent=1 // pred_check_branch
      %12 = sbr.rel (0) target = $region9
    $region8: #{decoder_forward.19} parent=1 // pred_region
      _
    $region9: #{decoder_forward.19} parent=1 // pred_fallthru
      _
    // Predicated region
    $region10: #{decoder_forward.19} parent=1 // pred_check
      _
    $region11: #{decoder_forward.19} parent=1 // pred_check_branch
      %14 = sbr.rel (0) target = $region13
    $region12: #{decoder_forward.19} parent=1 // pred_region
      _
    $region13: #{decoder_forward.19} parent=1 // pred_fallthru
      _
    %p16 = scmp.eq.s32.totalorder 0, 0
    // Predicated region
    $region14: #{decoder_forward.19} parent=1 // pred_check
      %p17 = pneg %p16
    $region15: #{decoder_forward.19} parent=1 // pred_check_branch
      %19 = sbr.rel (%p17) target = $region17
    $region16: #{decoder_forward.19} parent=1 // pred_region
      %vm20 = vcmask 523264
      %21 = vst.msk [vmem:[#allocation2] sm:$0xff] %vm20, 0.0
    $region17: #{decoder_forward.19} parent=1 // pred_fallthru
      _
    %v22 = vld [vmem:[#allocation2] sm:$0xff]
    %v23 = vld [vmem:[%s0] sm:$0xff]
    %v24 = vpack.c.bf16 %v23, %v23
    %v25 = vld [vmem:[%s1] sm:$0xf]
    %v26 = vld [vmem:[%s1 + $0x4] sm:$0xf]
    %v27 = vld [vmem:[%s1 + $0x8] sm:$0xf]
    %v28 = vld [vmem:[%s1 + $0xc] sm:$0xf]
    %v33 = vunpack.c.l.b16 %v25
    %v34 = vunpack.c.l.b16 %v26
    %v35 = vunpack.c.l.b16 %v27
    %v36 = vunpack.c.l.b16 %v28
    %v37 = vpack.c.b16 %v34, %v33
    %v38 = vpack.c.b16 %v36, %v35
    %vm41 = vcmask 261120
    %v43 = vsel %vm41, %v24, 0
    %45 = vmatpush.bf16.msra.mxu0 0
    %46 = vmatpush.bf16.msra.mxu0 0
    %47 = vmatpush.bf16.msra.mxu0 0
    %48 = vmatpush.bf16.msra.mxu0 0
    %49 = vmatpush.bf16.msra.mxu0 0
    %50 = vmatpush.bf16.msra.mxu0 0
    %51 = vmatpush.bf16.msra.mxu0 %v38
    %52 = vmatpush.bf16.msra.mxu0 %v37
    %53 = vmatmul.bf16.gmra.mxu0 %v43
    %v54 = vpop.f32.mrf.mxu0
    %v55 = vadd.f32 0.0, %v54
    %v56 = vpop.f32.mrf.mxu0
    %57 = vdwg.mxu0
    %v58 = vadd.f32 %v22, %v55
    %vm59 = vcmask 523264
    %60 = vst.msk [vmem:[#allocation2] sm:$0xff] %vm59, %v58
    // Predicated region
    $region18: #{decoder_forward.19} parent=1 // pred_check
      %p61 = pneg %p16
    $region19: #{decoder_forward.19} parent=1 // pred_check_branch
      %63 = sbr.rel (%p61) target = $region21
    $region20: #{decoder_forward.19} parent=1 // pred_region
      %v64 = vld [vmem:[#allocation2] sm:$0xff]
      %v65 = vld [vmem:[%s2] sm:$0x1]
      %v67 = vperm.slane %v65, 0
      %v69 = vadd.f32 %v64, %v67
      %70 = vst.msk [vmem:[#allocation3] sm:$0xff] %vm59, %v69
    $region21: #{decoder_forward.19} parent=1 // pred_fallthru
      _
    // Predicated region
    $region22: #{decoder_forward.19} parent=1 // pred_check
      _
    $region23: #{decoder_forward.19} parent=1 // pred_check_branch
      %72 = sbr.rel (0) target = $region25
    $region24: #{decoder_forward.19} parent=1 // pred_region
      %74 = vsyncadd [#allocation4], 0
      %s76 = sshll.u32 [#allocation3], 4
      %s77 = int_to_ptr.vmem [resolvable:$true] %s76
      %s78 = sshll.u32 %s3, 4
      %s79 = int_to_ptr.hbm [resolvable:$true] %s78
      %81 = dma.vmem_to_hbm [thread:$0]  %s77, 128, %s79, [#allocation4]
    $region25: #{decoder_forward.19} parent=1 // pred_fallthru
      _
    // Predicated region
    $region26: #{decoder_forward.19} parent=1 // pred_check
      _
    $region27: #{decoder_forward.19} parent=1 // pred_check_branch
      %83 = sbr.rel (0) target = $region29
    $region28: #{decoder_forward.19} parent=1 // pred_region
      %85 = dma.done [#allocation4], 128
    $region29: #{decoder_forward.19} parent=1 // pred_fallthru
      _
    %86 = vsyncpa [#allocation4], 1

// kernel: decoder_forward.16
$region0: #{decoder_forward.16}
  #allocation0 [shape = 'u32[]', space=smem, size = 0x4, offset = 0x4, fixed_abs, tag = 'smem constant byte address 0x4 - core index']
  #allocation1 [shape = 'u32[72,128]{1,0:T(1,128)}', space=vmem, size = 0x9000, scoped, tag = 'internal scratch']
  #allocation2 [shape = 'f32[2,32]{1,0:T(2,128)}', space=vmem, size = 0x400, scoped, tag = 'scratch operand']
  #allocation3 [shape = 'f32[2,32]{1,0:T(2,128)}', space=vmem, size = 0x400, scoped, tag = 'scratch operand']
  %s0 = inlined_call_operand.vmem [shape: f32[4,2,128], index: 0, kind: input, shape index: {}]
  %s1 = inlined_call_operand.vmem [shape: bf16[32,128], index: 1, kind: input, shape index: {}]
  %s2 = inlined_call_operand.vmem [shape: f32[4,2,32], index: 2, kind: input, shape index: {}]
  %s3 = inlined_call_operand.vmem [shape: f32[4,2,32], index: 3, kind: output, shape index: {}]
  %s4 = sld [smem:[#allocation0]]
  $region26: #{decoder_forward.16} parent=0
    _
  %s6 = ssub.s32 1, %s4
  %s7 = scalar_select 0, %s6, %s4
  // Predicated region
  $region2: #{decoder_forward.16} parent=0 // pred_check
    _
  $region3: #{decoder_forward.16} parent=0 // pred_check_branch
    %9 = sbr.rel (0) target = $region5
  $region4: #{decoder_forward.16} parent=0 // pred_region
    _
  $region5: #{decoder_forward.16} parent=0 // pred_fallthru
    _
  // Predicated region
  $region6: #{decoder_forward.16} parent=0 // pred_check
    _
  $region7: #{decoder_forward.16} parent=0 // pred_check_branch
    %11 = sbr.rel (0) target = $region9
  $region8: #{decoder_forward.16} parent=0 // pred_region
    _
  $region9: #{decoder_forward.16} parent=0 // pred_fallthru
    _
  // Predicated region
  $region10: #{decoder_forward.16} parent=0 // pred_check
    _
  $region11: #{decoder_forward.16} parent=0 // pred_check_branch
    %13 = sbr.rel (0) target = $region13
  $region12: #{decoder_forward.16} parent=0 // pred_region
    _
  $region13: #{decoder_forward.16} parent=0 // pred_fallthru
    _
  %p15 = scmp.eq.s32.totalorder 0, 0
  // Predicated region
  $region14: #{decoder_forward.16} parent=0 // pred_check
    %p16 = pneg %p15
  $region15: #{decoder_forward.16} parent=0 // pred_check_branch
    %18 = sbr.rel (%p16) target = $region17
  $region16: #{decoder_forward.16} parent=0 // pred_region
    %vm19 = vcmask 254976
    %20 = vst.msk [vmem:[#allocation2] sm:$0x3] %vm19, 0.0
    %21 = vst.msk [vmem:[#allocation3] sm:$0x3] %vm19, 0.0
  $region17: #{decoder_forward.16} parent=0 // pred_fallthru
    _
  %v22 = vld [vmem:[%s0] sm:$0x3]
  %v23 = vld [vmem:[#allocation2] sm:$0x3]
  %v24 = vpack.c.bf16 %v23, %v23
  %v25 = vld [vmem:[%s1] sm:$0xf]
  %v26 = vld [vmem:[%s1 + $0x4] sm:$0xf]
  %v27 = vld [vmem:[%s1 + $0x8] sm:$0xf]
  %v28 = vld [vmem:[%s1 + $0xc] sm:$0xf]
  %v33 = vunpack.c.l.b16 %v25
  %v34 = vunpack.c.l.b16 %v26
  %v35 = vunpack.c.l.b16 %v27
  %v36 = vunpack.c.l.b16 %v28
  %v37 = vpack.c.b16 %v34, %v33
  %v38 = vpack.c.b16 %v36, %v35
  %vm41 = vcmask 261120
  %v43 = vsel %vm41, %v24, 0
  %45 = vmatpush.bf16.msra.mxu0 0
  %46 = vmatpush.bf16.msra.mxu0 0
  %47 = vmatpush.bf16.msra.mxu0 0
  %48 = vmatpush.bf16.msra.mxu0 0
  %49 = vmatpush.bf16.msra.mxu0 0
  %50 = vmatpush.bf16.msra.mxu0 0
  %51 = vmatpush.bf16.msra.mxu0 %v38
  %52 = vmatpush.bf16.msra.mxu0 %v37
  %53 = vmatmul.bf16.gmra.mxu0 %v43
  %v54 = vpop.f32.mrf.mxu0
  %v55 = vadd.f32 0.0, %v54
  %v56 = vpop.f32.mrf.mxu0
  %57 = vdwg.mxu0
  %v58 = vadd.f32 %v22, %v55
  %v59 = vxor.u32 %v58, 2147483648
  %v60 = vmul.f32 %v59, 1.442695
  %v61 = vpow.pop %v60
  %v62 = vadd.f32 %v61, 1.0
  %v63 = vrcp.pop %v62
  %v64 = vmul.f32 %v62, %v63
  %v65 = vsub.f32 1.0, %v64
  %v66 = vmul.f32 %v63, %v65
  %v67 = vadd.f32 %v63, %v66
  %vm68 = vweird.f32 %v62
  %vm69 = vweird.f32 %v63
  %vm70 = vmor %vm68, %vm69
  %v71 = vsel %vm70, %v63, %v67
  %v72 = vand.u32 2147483647, %v62
  %vm73 = vcmp.eq.f32.partialorder %v72, 8.507059e+37
  %v74 = vand.u32 %v62, 2147483648
  %v75 = vor.u32 1.1754944e-38, %v74
  %v76 = vsel %vm73, %v75, %v71
  %v77 = vmul.f32 1.0, %v76
  %v78 = vtanh.pop %v58
  %v79 = vld [vmem:[#allocation3] sm:$0x3]
  %81 = vrot.lane.b32.xlu0 %v79, 32
  %v82 = vpop.permute.xlu0 %81
  %v84 = vmul.f32 %v77, %v82
  %86 = vrot.lane.b32.xlu0 %v78, 64
  %v87 = vpop.permute.xlu0 %86
  %v89 = vmul.f32 %v77, %v87
  %91 = vrot.lane.b32.xlu0 %v89, 32
  %v92 = vpop.permute.xlu0 %91
  %v94 = vadd.f32 %v84, %v92
  %v95 = vtanh.pop %v94
  %97 = vrot.lane.b32.xlu0 %v95, 64
  %v98 = vpop.permute.xlu0 %97
  %v100 = vmul.f32 %v77, %v98
  %102 = vrot.lane.b32.xlu0 %v94, 96
  %v103 = vpop.permute.xlu0 %102
  %vm105 = vcmask 254976
  %106 = vst.msk [vmem:[#allocation3] sm:$0x3] %vm105, %v103
  %108 = vrot.lane.b32.xlu0 %v100, 32
  %v109 = vpop.permute.xlu0 %108
  %111 = vst.msk [vmem:[#allocation2] sm:$0x3] %vm105, %v109
  %v112 = vld [vmem:[%s2] sm:$0x3]
  %114 = vrot.lane.b32.xlu0 %v112, 96
  %v115 = vpop.permute.xlu0 %114
  %v117 = vadd.f32 %v100, %v115
  %119 = vrot.lane.b32.xlu0 %v117, 32
  %v120 = vpop.permute.xlu0 %119
  %122 = vst.msk [vmem:[%s3] sm:$0x3] %vm105, %v120
  %s123 = scalar_lea.vmem %s0, 2
  %v124 = vld [vmem:[%s123] sm:$0x3]
  %v125 = vld [vmem:[#allocation2] sm:$0x3]
  %v126 = vpack.c.bf16 %v125, %v125
  %v127 = vld [vmem:[%s1] sm:$0xf]
  %v128 = vld [vmem:[%s1 + $0x4] sm:$0xf]
  %v129 = vld [vmem:[%s1 + $0x8] sm:$0xf]
  %v130 = vld [vmem:[%s1 + $0xc] sm:$0xf]
  %v135 = vunpack.c.l.b16 %v127
  %v136 = vunpack.c.l.b16 %v128
  %v137 = vunpack.c.l.b16 %v129
  %v138 = vunpack.c.l.b16 %v130
  %v139 = vpack.c.b16 %v136, %v135
  %v140 = vpack.c.b16 %v138, %v137
  %v144 = vsel %vm41, %v126, 0
  %146 = vmatpush.bf16.msra.mxu0 0
  %147 = vmatpush.bf16.msra.mxu0 0
  %148 = vmatpush.bf16.msra.mxu0 0
  %149 = vmatpush.bf16.msra.mxu0 0
  %150 = vmatpush.bf16.msra.mxu0 0
  %151 = vmatpush.bf16.msra.mxu0 0
  %152 = vmatpush.bf16.msra.mxu0 %v140
  %153 = vmatpush.bf16.msra.mxu0 %v139
  %154 = vmatmul.bf16.gmra.mxu0 %v144
  %v155 = vpop.f32.mrf.mxu0
  %v156 = vadd.f32 0.0, %v155
  %v157 = vpop.f32.mrf.mxu0
  %158 = vdwg.mxu0
  %v159 = vadd.f32 %v124, %v156
  %v160 = vxor.u32 %v159, 2147483648
  %v161 = vmul.f32 %v160, 1.442695
  %v162 = vpow.pop %v161
  %v163 = vadd.f32 %v162, 1.0
  %v164 = vrcp.pop %v163
  %v165 = vmul.f32 %v163, %v164
  %v166 = vsub.f32 1.0, %v165
  %v167 = vmul.f32 %v164, %v166
  %v168 = vadd.f32 %v164, %v167
  %vm169 = vweird.f32 %v163
  %vm170 = vweird.f32 %v164
  %vm171 = vmor %vm169, %vm170
  %v172 = vsel %vm171, %v164, %v168
  %v173 = vand.u32 2147483647, %v163
  %vm174 = vcmp.eq.f32.partialorder %v173, 8.507059e+37
  %v175 = vand.u32 %v163, 2147483648
  %v176 = vor.u32 1.1754944e-38, %v175
  %v177 = vsel %vm174, %v176, %v172
  %v178 = vmul.f32 1.0, %v177
  %v179 = vtanh.pop %v159
  %v180 = vld [vmem:[#allocation3] sm:$0x3]
  %182 = vrot.lane.b32.xlu0 %v180, 32
  %v183 = vpop.permute.xlu0 %182
  %v185 = vmul.f32 %v178, %v183
  %187 = vrot.lane.b32.xlu0 %v179, 64
  %v188 = vpop.permute.xlu0 %187
  %v190 = vmul.f32 %v178, %v188
  %192 = vrot.lane.b32.xlu0 %v190, 32
  %v193 = vpop.permute.xlu0 %192
  %v195 = vadd.f32 %v185, %v193
  %v196 = vtanh.pop %v195
  %198 = vrot.lane.b32.xlu0 %v196, 64
  %v199 = vpop.permute.xlu0 %198
  %v201 = vmul.f32 %v178, %v199
  %203 = vrot.lane.b32.xlu0 %v195, 96
  %v204 = vpop.permute.xlu0 %203
  %206 = vst.msk [vmem:[#allocation3] sm:$0x3] %vm105, %v204
  %208 = vrot.lane.b32.xlu0 %v201, 32
  %v209 = vpop.permute.xlu0 %208
  %211 = vst.msk [vmem:[#allocation2] sm:$0x3] %vm105, %v209
  %s212 = scalar_lea.vmem %s2, 2
  %v213 = vld [vmem:[%s212] sm:$0x3]
  %215 = vrot.lane.b32.xlu0 %v213, 96
  %v216 = vpop.permute.xlu0 %215
  %v218 = vadd.f32 %v201, %v216
  %220 = vrot.lane.b32.xlu0 %v218, 32
  %v221 = vpop.permute.xlu0 %220
  %s223 = scalar_lea.vmem %s3, 2
  %224 = vst.msk [vmem:[%s223] sm:$0x3] %vm105, %v221
  %s225 = scalar_lea.vmem %s0, 4
  %v226 = vld [vmem:[%s225] sm:$0x3]
  %v227 = vld [vmem:[#allocation2] sm:$0x3]
  %v228 = vpack.c.bf16 %v227, %v227
  %v229 = vld [vmem:[%s1] sm:$0xf]
  %v230 = vld [vmem:[%s1 + $0x4] sm:$0xf]
  %v231 = vld [vmem:[%s1 + $0x8] sm:$0xf]
  %v232 = vld [vmem:[%s1 + $0xc] sm:$0xf]
  %v237 = vunpack.c.l.b16 %v229
  %v238 = vunpack.c.l.b16 %v230
  %v239 = vunpack.c.l.b16 %v231
  %v240 = vunpack.c.l.b16 %v232
  %v241 = vpack.c.b16 %v238, %v237
  %v242 = vpack.c.b16 %v240, %v239
  %v246 = vsel %vm41, %v228, 0
  %248 = vmatpush.bf16.msra.mxu0 0
  %249 = vmatpush.bf16.msra.mxu0 0
  %250 = vmatpush.bf16.msra.mxu0 0
  %251 = vmatpush.bf16.msra.mxu0 0
  %252 = vmatpush.bf16.msra.mxu0 0
  %253 = vmatpush.bf16.msra.mxu0 0
  %254 = vmatpush.bf16.msra.mxu0 %v242
  %255 = vmatpush.bf16.msra.mxu0 %v241
  %256 = vmatmul.bf16.gmra.mxu0 %v246
  %v257 = vpop.f32.mrf.mxu0
  %v258 = vadd.f32 0.0, %v257
  %v259 = vpop.f32.mrf.mxu0
  %260 = vdwg.mxu0
  %v261 = vadd.f32 %v226, %v258
  %v262 = vxor.u32 %v261, 2147483648
  %v263 = vmul.f32 %v262, 1.442695
  %v264 = vpow.pop %v263
  %v265 = vadd.f32 %v264, 1.0
  %v266 = vrcp.pop %v265
  %v267 = vmul.f32 %v265, %v266
  %v268 = vsub.f32 1.0, %v267
  %v269 = vmul.f32 %v266, %v268
  %v270 = vadd.f32 %v266, %v269
  %vm271 = vweird.f32 %v265
  %vm272 = vweird.f32 %v266
  %vm273 = vmor %vm271, %vm272
  %v274 = vsel %vm273, %v266, %v270
  %v275 = vand.u32 2147483647, %v265
  %vm276 = vcmp.eq.f32.partialorder %v275, 8.507059e+37
  %v277 = vand.u32 %v265, 2147483648
  %v278 = vor.u32 1.1754944e-38, %v277
  %v279 = vsel %vm276, %v278, %v274
  %v280 = vmul.f32 1.0, %v279
  %v281 = vtanh.pop %v261
  %v282 = vld [vmem:[#allocation3] sm:$0x3]
  %284 = vrot.lane.b32.xlu0 %v282, 32
  %v285 = vpop.permute.xlu0 %284
  %v287 = vmul.f32 %v280, %v285
  %289 = vrot.lane.b32.xlu0 %v281, 64
  %v290 = vpop.permute.xlu0 %289
  %v292 = vmul.f32 %v280, %v290
  %294 = vrot.lane.b32.xlu0 %v292, 32
  %v295 = vpop.permute.xlu0 %294
  %v297 = vadd.f32 %v287, %v295
  %v298 = vtanh.pop %v297
  %300 = vrot.lane.b32.xlu0 %v298, 64
  %v301 = vpop.permute.xlu0 %300
  %v303 = vmul.f32 %v280, %v301
  %305 = vrot.lane.b32.xlu0 %v297, 96
  %v306 = vpop.permute.xlu0 %305
  %308 = vst.msk [vmem:[#allocation3] sm:$0x3] %vm105, %v306
  %310 = vrot.lane.b32.xlu0 %v303, 32
  %v311 = vpop.permute.xlu0 %310
  %313 = vst.msk [vmem:[#allocation2] sm:$0x3] %vm105, %v311
  %s314 = scalar_lea.vmem %s2, 4
  %v315 = vld [vmem:[%s314] sm:$0x3]
  %317 = vrot.lane.b32.xlu0 %v315, 96
  %v318 = vpop.permute.xlu0 %317
  %v320 = vadd.f32 %v303, %v318
  %322 = vrot.lane.b32.xlu0 %v320, 32
  %v323 = vpop.permute.xlu0 %322
  %s325 = scalar_lea.vmem %s3, 4
  %326 = vst.msk [vmem:[%s325] sm:$0x3] %vm105, %v323
  %s327 = scalar_lea.vmem %s0, 6
  %v328 = vld [vmem:[%s327] sm:$0x3]
  %v329 = vld [vmem:[#allocation2] sm:$0x3]
  %v330 = vpack.c.bf16 %v329, %v329
  %v331 = vld [vmem:[%s1] sm:$0xf]
  %v332 = vld [vmem:[%s1 + $0x4] sm:$0xf]
  %v333 = vld [vmem:[%s1 + $0x8] sm:$0xf]
  %v334 = vld [vmem:[%s1 + $0xc] sm:$0xf]
  %v339 = vunpack.c.l.b16 %v331
  %v340 = vunpack.c.l.b16 %v332
  %v341 = vunpack.c.l.b16 %v333
  %v342 = vunpack.c.l.b16 %v334
  %v343 = vpack.c.b16 %v340, %v339
  %v344 = vpack.c.b16 %v342, %v341
  %v348 = vsel %vm41, %v330, 0
  %350 = vmatpush.bf16.msra.mxu0 0
  %351 = vmatpush.bf16.msra.mxu0 0
  %352 = vmatpush.bf16.msra.mxu0 0
  %353 = vmatpush.bf16.msra.mxu0 0
  %354 = vmatpush.bf16.msra.mxu0 0
  %355 = vmatpush.bf16.msra.mxu0 0
  %356 = vmatpush.bf16.msra.mxu0 %v344
  %357 = vmatpush.bf16.msra.mxu0 %v343
  %358 = vmatmul.bf16.gmra.mxu0 %v348
  %v359 = vpop.f32.mrf.mxu0
  %v360 = vadd.f32 0.0, %v359
  %v361 = vpop.f32.mrf.mxu0
  %362 = vdwg.mxu0
  %v363 = vadd.f32 %v328, %v360
  %v364 = vxor.u32 %v363, 2147483648
  %v365 = vmul.f32 %v364, 1.442695
  %v366 = vpow.pop %v365
  %v367 = vadd.f32 %v366, 1.0
  %v368 = vrcp.pop %v367
  %v369 = vmul.f32 %v367, %v368
  %v370 = vsub.f32 1.0, %v369
  %v371 = vmul.f32 %v368, %v370
  %v372 = vadd.f32 %v368, %v371
  %vm373 = vweird.f32 %v367
  %vm374 = vweird.f32 %v368
  %vm375 = vmor %vm373, %vm374
  %v376 = vsel %vm375, %v368, %v372
  %v377 = vand.u32 2147483647, %v367
  %vm378 = vcmp.eq.f32.partialorder %v377, 8.507059e+37
  %v379 = vand.u32 %v367, 2147483648
  %v380 = vor.u32 1.1754944e-38, %v379
  %v381 = vsel %vm378, %v380, %v376
  %v382 = vmul.f32 1.0, %v381
  %v383 = vtanh.pop %v363
  %v384 = vld [vmem:[#allocation3] sm:$0x3]
  %386 = vrot.lane.b32.xlu0 %v384, 32
  %v387 = vpop.permute.xlu0 %386
  %v389 = vmul.f32 %v382, %v387
  %391 = vrot.lane.b32.xlu0 %v383, 64
  %v392 = vpop.permute.xlu0 %391
  %v394 = vmul.f32 %v382, %v392
  %396 = vrot.lane.b32.xlu0 %v394, 32
  %v397 = vpop.permute.xlu0 %396
  %v399 = vadd.f32 %v389, %v397
  %v400 = vtanh.pop %v399
  %402 = vrot.lane.b32.xlu0 %v400, 64
  %v403 = vpop.permute.xlu0 %402
  %v405 = vmul.f32 %v382, %v403
  %407 = vrot.lane.b32.xlu0 %v399, 96
  %v408 = vpop.permute.xlu0 %407
  %410 = vst.msk [vmem:[#allocation3] sm:$0x3] %vm105, %v408
  %412 = vrot.lane.b32.xlu0 %v405, 32
  %v413 = vpop.permute.xlu0 %412
  %415 = vst.msk [vmem:[#allocation2] sm:$0x3] %vm105, %v413
  %s416 = scalar_lea.vmem %s2, 6
  %v417 = vld [vmem:[%s416] sm:$0x3]
  %419 = vrot.lane.b32.xlu0 %v417, 96
  %v420 = vpop.permute.xlu0 %419
  %v422 = vadd.f32 %v405, %v420
  %424 = vrot.lane.b32.xlu0 %v422, 32
  %v425 = vpop.permute.xlu0 %424
  %s427 = scalar_lea.vmem %s3, 6
  %428 = vst.msk [vmem:[%s427] sm:$0x3] %vm105, %v425
  // Predicated region
  $region18: #{decoder_forward.16} parent=0 // pred_check
    _
  $region19: #{decoder_forward.16} parent=0 // pred_check_branch
    %430 = sbr.rel (0) target = $region21
  $region20: #{decoder_forward.16} parent=0 // pred_region
    _
  $region21: #{decoder_forward.16} parent=0 // pred_fallthru
    _
  // Predicated region
  $region22: #{decoder_forward.16} parent=0 // pred_check
    _
  $region23: #{decoder_forward.16} parent=0 // pred_check_branch
    %432 = sbr.rel (0) target = $region25
  $region24: #{decoder_forward.16} parent=0 // pred_region
    _
  $region25: #{decoder_forward.16} parent=0 // pred_fallthru
    _

</llo_original>
